<compile_context>
chip_gen: v7x
topology: tpu7x:2x2x1
jax: 0.10.0
libtpu: 0.0.40
codegen_flags: <defaults>
</compile_context>

<pallas_src>
import jax
import jax.numpy as jnp
from jax import lax
from jax.experimental import pallas as pl
from jax.experimental.pallas import tpu as pltpu

# ---- module config (small, consistent with the module's forward) ----
INPUT_SIZE = 4     # input_size
HIDDEN = 16        # n_hiddens
OUTPUT_SIZE = 2    # output_size
SEQ_LEN = 9        # seq_len (kernel sequence length == dense expects SEQ_LEN*HIDDEN)
BATCH = 2


def simp_att_lstm_kernel(x_tm_ref, x_bm_ref, w_att_ref, b_att_ref,
                         wih_ref, whh_ref, b_ref, w_d_ref, b_d_ref,   # inputs
                         out_ref, att_ref,                            # outputs
                         xg_scr, hcat_scr):                           # VMEM scratch
    # x_tm_ref:  (S*B, D)    time-major flat input, rows ordered s*B + b
    # x_bm_ref:  (B, S*D)    batch-major flat input (lane-dense, for attention scores)
    # w_att_ref: (S*D, S)    block-diagonal attention scoring weight
    # b_att_ref: (1, 1)      attention scoring bias
    # wih_ref:   (D, 4H)     fused input->hidden weights, gate order i|f|g|o
    # whh_ref:   (H, 4H)     fused hidden->hidden weights, gate order i|f|g|o
    # b_ref:     (1, 4H)     fused b_ih + b_hh
    # w_d_ref:   (S*H, O)    dense weight over the flattened sequence
    # b_d_ref:   (1, O)
    # out_ref:   (B, O)
    # att_ref:   (B, S)      attention weights (softmax over time), lane-dense
    # xg_scr:    (S*B, 4H)   scratch: hoisted x @ W_ih (all gates, all steps)
    # hcat_scr:  (B, S*H)    scratch: concatenated hidden states for fused dense
    B, S = att_ref.shape
    H = whh_ref.shape[0]
    f32 = jnp.float32

    # ---- attention: lane-major (B, S) scores, full-vreg softmax, one store ----
    e = jnp.tanh(
        jnp.dot(x_bm_ref[...], w_att_ref[...], preferred_element_type=f32)
        + b_att_ref[...])                                           # (B, S)
    m = jnp.max(e, axis=-1, keepdims=True)                          # (B, 1)
    p = jnp.exp(e - m)                                              # (B, S)
    z = jnp.sum(p, axis=-1, keepdims=True)                          # (B, 1)
    alpha = p / z                                                   # (B, S)
    att_ref[...] = alpha                                            # single store

    # ---- ONE fused input matmul for all gates & all timesteps (hoisted) ----
    xg_scr[...] = jnp.dot(x_tm_ref[...], wih_ref[...],
                          preferred_element_type=f32)               # (S*B, 4H)

    whh = whh_ref[...]                                              # (H, 4H)
    bias = jnp.broadcast_to(b_ref[...], (B, 4 * H))                 # hoisted broadcast

    # Pre-gate inputs per step: (alpha*x)@W == alpha*(x@W); bias added AFTER the
    # alpha scale. All of this is independent of h -> off the serial chain.
    gpre = [alpha[:, s:s + 1] * xg_scr[s * B:(s + 1) * B, :] + bias
            for s in range(S)]                                      # each (B, 4H)

    # ---- LSTM recurrence, fully unrolled; ONE fused MXU dot per step ----
    h = jnp.zeros((B, H), f32)
    c = jnp.zeros((B, H), f32)
    for s in range(S):
        g = gpre[s] + jnp.dot(h, whh, preferred_element_type=f32)   # (B, 4H)
        sg = jax.nn.sigmoid(g)                                      # full-slab sigmoid
        gi = sg[:, 0:H]
        gf = sg[:, H:2 * H]
        go = sg[:, 3 * H:4 * H]
        gg = jnp.tanh(g[:, 2 * H:3 * H])                            # tanh on g lanes
        c = gf * c + gi * gg
        h = go * jnp.tanh(c)
        hcat_scr[:, s * H:(s + 1) * H] = h                          # off-chain store

    # ---- fused dense over the flattened sequence: ONE matmul ----
    out_ref[...] = (jnp.dot(hcat_scr[...], w_d_ref[...],
                            preferred_element_type=f32) + b_d_ref[...])


def prepare_params(raw_params):
    """One-time weight preparation (fused/transposed layouts; not per call)."""
    w_att, b_att, w_ih, w_hh, b_ih, b_hh, w_dense, b_dense = raw_params
    f32 = jnp.float32
    # block-diagonal attention scoring weight: (S*D, S), block (s, s) == w_att^T
    w_att_blk = jnp.kron(jnp.eye(SEQ_LEN, dtype=f32),
                         jnp.transpose(w_att).astype(f32))               # (S*D, S)
    b_att_p = b_att.reshape(1, 1).astype(f32)                            # (1, 1)
    # PyTorch LSTM gate order along the 4H axis is i|f|g|o already.
    wih_f = jnp.transpose(w_ih).astype(f32)                              # (D, 4H)
    whh_f = jnp.transpose(w_hh).astype(f32)                              # (H, 4H)
    bias_f = (b_ih + b_hh).reshape(1, 4 * HIDDEN).astype(f32)            # (1, 4H)
    w_d_p = jnp.transpose(w_dense).astype(f32)                           # (S*H, O)
    b_d_p = b_dense.reshape(1, OUTPUT_SIZE).astype(f32)                  # (1, O)
    return (w_att_blk, b_att_p, wih_f, whh_f, bias_f, w_d_p, b_d_p)


def simp_att_input_forward(x, prepped):
    """x: (B, S, D) batch-first, like the PyTorch module. Returns (out, att_weights)."""
    w_att_blk, b_att_p, wih_f, whh_f, bias_f, w_d_p, b_d_p = prepped
    bsz, seq, d = x.shape
    x32 = x.astype(jnp.float32)
    # time-major flat view (row = s*B + b) for the fused input matmul
    x_tm = jnp.transpose(x32, (1, 0, 2)).reshape(seq * bsz, d)
    # batch-major flat view (lane-dense) for the attention scores
    x_bm = x32.reshape(bsz, seq * d)

    vmem = pl.BlockSpec(memory_space=pltpu.MemorySpace.VMEM)
    out, att = pl.pallas_call(
        simp_att_lstm_kernel,
        out_shape=(jax.ShapeDtypeStruct((bsz, OUTPUT_SIZE), jnp.float32),
                   jax.ShapeDtypeStruct((bsz, seq), jnp.float32)),
        in_specs=[vmem] * 9,
        out_specs=(vmem, vmem),
        scratch_shapes=[pltpu.VMEM((seq * bsz, 4 * HIDDEN), jnp.float32),
                        pltpu.VMEM((bsz, seq * HIDDEN), jnp.float32)],
    )(x_tm, x_bm, w_att_blk, b_att_p, wih_f, whh_f, bias_f, w_d_p, b_d_p)
    return out, att                                                  # att already (B, S)


forward = jax.jit(simp_att_input_forward)


def reference_forward(x, raw_params):
    """Pure-JAX reference mirroring the PyTorch SimpAttInput forward."""
    w_att, b_att, w_ih, w_hh, b_ih, b_hh, w_dense, b_dense = raw_params
    bsz = x.shape[0]

    # simple input attention: score -> softmax over time -> elementwise reweight
    e = jnp.tanh(jnp.squeeze(x @ jnp.transpose(w_att), -1) + b_att)          # (B, S)
    m = jnp.max(e, axis=1, keepdims=True)
    p = jnp.exp(e - m)
    alpha = p / jnp.sum(p, axis=1, keepdims=True)                            # (B, S)
    att_out = x * alpha[:, :, None]                                          # (B, S, D)

    def step(carry, x_t):
        h, c = carry
        gates = x_t @ w_ih.T + h @ w_hh.T + b_ih + b_hh
        i = jax.nn.sigmoid(gates[:, 0 * HIDDEN:1 * HIDDEN])
        f = jax.nn.sigmoid(gates[:, 1 * HIDDEN:2 * HIDDEN])
        g = jnp.tanh(gates[:, 2 * HIDDEN:3 * HIDDEN])
        o = jax.nn.sigmoid(gates[:, 3 * HIDDEN:4 * HIDDEN])
        c = f * c + i * g
        h = o * jnp.tanh(c)
        return (h, c), h

    h0 = jnp.zeros((bsz, HIDDEN), jnp.float32)
    _, hs = lax.scan(step, (h0, jnp.zeros_like(h0)),
                     jnp.transpose(att_out, (1, 0, 2)))                      # (S, B, H)
    flat = jnp.transpose(hs, (1, 0, 2)).reshape(bsz, -1)                     # (B, S*H)
    out = flat @ w_dense.T + b_dense
    return out, alpha


def init_params(key):
    """Deterministic synthetic weights, PyTorch-style uniform init."""
    ks = jax.random.split(key, 8)
    sa = 1.0 / jnp.sqrt(jnp.float32(INPUT_SIZE))
    w_att = jax.random.uniform(ks[0], (1, INPUT_SIZE), jnp.float32, -sa, sa)
    b_att = jax.random.uniform(ks[1], (1,), jnp.float32, -sa, sa)
    s = 1.0 / jnp.sqrt(jnp.float32(HIDDEN))
    w_ih = jax.random.uniform(ks[2], (4 * HIDDEN, INPUT_SIZE), jnp.float32, -s, s)
    w_hh = jax.random.uniform(ks[3], (4 * HIDDEN, HIDDEN), jnp.float32, -s, s)
    b_ih = jax.random.uniform(ks[4], (4 * HIDDEN,), jnp.float32, -s, s)
    b_hh = jax.random.uniform(ks[5], (4 * HIDDEN,), jnp.float32, -s, s)
    sd = 1.0 / jnp.sqrt(jnp.float32(SEQ_LEN * HIDDEN))
    w_dense = jax.random.uniform(ks[6], (OUTPUT_SIZE, SEQ_LEN * HIDDEN),
                                 jnp.float32, -sd, sd)
    b_dense = jax.random.uniform(ks[7], (OUTPUT_SIZE,), jnp.float32, -sd, sd)
    return (w_att, b_att, w_ih, w_hh, b_ih, b_hh, w_dense, b_dense)


if __name__ == "__main__":
    key = jax.random.PRNGKey(0)
    kx, kp = jax.random.split(key)
    x = jax.random.normal(kx, (BATCH, SEQ_LEN, INPUT_SIZE), jnp.float32)
    raw_params = init_params(kp)
    prepped = prepare_params(raw_params)   # one-time weight prep (not per call)

    out, att_w = forward(x, prepped)
    out = jax.block_until_ready(out)
    att_w = jax.block_until_ready(att_w)

    ref_out, ref_att = reference_forward(x, raw_params)

    assert out.shape == (BATCH, OUTPUT_SIZE), out.shape
    assert att_w.shape == (BATCH, SEQ_LEN), att_w.shape
    assert jnp.allclose(out, ref_out, atol=1e-5, rtol=1e-4), (out, ref_out)
    assert jnp.allclose(att_w, ref_att, atol=1e-5, rtol=1e-4), (att_w, ref_att)
    print("KERNEL_OK")
</pallas_src>

<mosaic_0001>
module attributes {stable_mosaic.version = 11 : i64} {
  func.func @simp_att_lstm_kernel(%arg0: memref<18x4xf32, #tpu.memory_space<vmem>>, %arg1: memref<2x36xf32, #tpu.memory_space<vmem>>, %arg2: memref<36x9xf32, #tpu.memory_space<vmem>>, %arg3: memref<1x1xf32, #tpu.memory_space<vmem>>, %arg4: memref<4x64xf32, #tpu.memory_space<vmem>>, %arg5: memref<16x64xf32, #tpu.memory_space<vmem>>, %arg6: memref<1x64xf32, #tpu.memory_space<vmem>>, %arg7: memref<144x2xf32, #tpu.memory_space<vmem>>, %arg8: memref<1x2xf32, #tpu.memory_space<vmem>>, %arg9: memref<2x2xf32, #tpu.memory_space<vmem>>, %arg10: memref<2x9xf32, #tpu.memory_space<vmem>>, %arg11: memref<18x64xf32, #tpu.memory_space<vmem>>, %arg12: memref<2x144xf32, #tpu.memory_space<vmem>>) attributes {dimension_semantics = [], scalar_prefetch = 0 : i64, scratch_operands = 2 : i64, tpu.core_type = #tpu.core_type<tc>} {
    %c0 = arith.constant 0 : index
    %c0_0 = arith.constant 0 : index
    %0 = vector.load %arg1[%c0, %c0_0] : memref<2x36xf32, #tpu.memory_space<vmem>>, vector<2x36xf32>
    %c0_1 = arith.constant 0 : index
    %c0_2 = arith.constant 0 : index
    %1 = vector.load %arg2[%c0_1, %c0_2] : memref<36x9xf32, #tpu.memory_space<vmem>>, vector<36x9xf32>
    %cst = arith.constant dense<0.000000e+00> : vector<2x9xf32>
    %2 = tpu.matmul %0, %1, %cst {dimension_numbers = #tpu.dot_dimension_numbers<[1], [0], [0], [1], [0, 0, 1, 1], [], []>} : vector<2x36xf32>, vector<36x9xf32>, vector<2x9xf32> -> vector<2x9xf32>
    %c0_3 = arith.constant 0 : index
    %c0_4 = arith.constant 0 : index
    %3 = vector.load %arg3[%c0_3, %c0_4] : memref<1x1xf32, #tpu.memory_space<vmem>>, vector<1x1xf32>
    %4 = vector.broadcast %3 : vector<1x1xf32> to vector<2x9xf32>
    %5 = arith.addf %2, %4 : vector<2x9xf32>
    %6 = math.tanh %5 : vector<2x9xf32>
    %cst_5 = arith.constant dense<0xFF800000> : vector<2xf32>
    %7 = vector.multi_reduction <maximumf>, %6, %cst_5 [1] : vector<2x9xf32> to vector<2xf32>
    %8 = vector.shape_cast %7 : vector<2xf32> to vector<2x1xf32>
    %9 = vector.broadcast %8 : vector<2x1xf32> to vector<2x9xf32>
    %10 = arith.subf %6, %9 : vector<2x9xf32>
    %11 = math.exp %10 : vector<2x9xf32>
    %cst_6 = arith.constant dense<0.000000e+00> : vector<2xf32>
    %12 = vector.multi_reduction <add>, %11, %cst_6 [1] : vector<2x9xf32> to vector<2xf32>
    %13 = vector.shape_cast %12 : vector<2xf32> to vector<2x1xf32>
    %14 = vector.broadcast %13 : vector<2x1xf32> to vector<2x9xf32>
    %15 = arith.divf %11, %14 : vector<2x9xf32>
    %c0_7 = arith.constant 0 : index
    %c0_8 = arith.constant 0 : index
    %16 = vector.load %arg10[%c0_7, %c0_8] : memref<2x9xf32, #tpu.memory_space<vmem>>, vector<2x9xf32>
    tpu.vector_store %arg10[%c0_7, %c0_8], %15 {strides = array<i32>} : memref<2x9xf32, #tpu.memory_space<vmem>>, vector<2x9xf32>,
    %c0_9 = arith.constant 0 : index
    %c0_10 = arith.constant 0 : index
    %17 = vector.load %arg0[%c0_9, %c0_10] : memref<18x4xf32, #tpu.memory_space<vmem>>, vector<18x4xf32>
    %c0_11 = arith.constant 0 : index
    %c0_12 = arith.constant 0 : index
    %18 = vector.load %arg4[%c0_11, %c0_12] : memref<4x64xf32, #tpu.memory_space<vmem>>, vector<4x64xf32>
    %cst_13 = arith.constant dense<0.000000e+00> : vector<18x64xf32>
    %19 = tpu.matmul %17, %18, %cst_13 {dimension_numbers = #tpu.dot_dimension_numbers<[1], [0], [0], [1], [0, 0, 1, 1], [], []>} : vector<18x4xf32>, vector<4x64xf32>, vector<18x64xf32> -> vector<18x64xf32>
    %c0_14 = arith.constant 0 : index
    %c0_15 = arith.constant 0 : index
    %20 = vector.load %arg11[%c0_14, %c0_15] : memref<18x64xf32, #tpu.memory_space<vmem>>, vector<18x64xf32>
    tpu.vector_store %arg11[%c0_14, %c0_15], %19 {strides = array<i32>} : memref<18x64xf32, #tpu.memory_space<vmem>>, vector<18x64xf32>,
    %c0_16 = arith.constant 0 : index
    %c0_17 = arith.constant 0 : index
    %21 = vector.load %arg5[%c0_16, %c0_17] : memref<16x64xf32, #tpu.memory_space<vmem>>, vector<16x64xf32>
    %c0_18 = arith.constant 0 : index
    %c0_19 = arith.constant 0 : index
    %22 = vector.load %arg6[%c0_18, %c0_19] : memref<1x64xf32, #tpu.memory_space<vmem>>, vector<1x64xf32>
    %23 = vector.shape_cast %22 : vector<1x64xf32> to vector<1x64xf32>
    %24 = vector.broadcast %23 : vector<1x64xf32> to vector<2x64xf32>
    %25 = vector.extract_strided_slice %15 {offsets = [0, 0], sizes = [2, 1], strides = [1, 1]} : vector<2x9xf32> to vector<2x1xf32>
    %c0_20 = arith.constant 0 : index
    %c0_21 = arith.constant 0 : index
    %26 = vector.load %arg11[%c0_20, %c0_21] : memref<18x64xf32, #tpu.memory_space<vmem>>, vector<2x64xf32>
    %27 = vector.broadcast %25 : vector<2x1xf32> to vector<2x64xf32>
    %28 = arith.mulf %27, %26 : vector<2x64xf32>
    %29 = arith.addf %28, %24 : vector<2x64xf32>
    %30 = vector.extract_strided_slice %15 {offsets = [0, 1], sizes = [2, 1], strides = [1, 1]} : vector<2x9xf32> to vector<2x1xf32>
    %c2 = arith.constant 2 : index
    %c0_22 = arith.constant 0 : index
    %31 = vector.load %arg11[%c2, %c0_22] : memref<18x64xf32, #tpu.memory_space<vmem>>, vector<2x64xf32>
    %32 = vector.broadcast %30 : vector<2x1xf32> to vector<2x64xf32>
    %33 = arith.mulf %32, %31 : vector<2x64xf32>
    %34 = arith.addf %33, %24 : vector<2x64xf32>
    %35 = vector.extract_strided_slice %15 {offsets = [0, 2], sizes = [2, 1], strides = [1, 1]} : vector<2x9xf32> to vector<2x1xf32>
    %c4 = arith.constant 4 : index
    %c0_23 = arith.constant 0 : index
    %36 = vector.load %arg11[%c4, %c0_23] : memref<18x64xf32, #tpu.memory_space<vmem>>, vector<2x64xf32>
    %37 = vector.broadcast %35 : vector<2x1xf32> to vector<2x64xf32>
    %38 = arith.mulf %37, %36 : vector<2x64xf32>
    %39 = arith.addf %38, %24 : vector<2x64xf32>
    %40 = vector.extract_strided_slice %15 {offsets = [0, 3], sizes = [2, 1], strides = [1, 1]} : vector<2x9xf32> to vector<2x1xf32>
    %c6 = arith.constant 6 : index
    %c0_24 = arith.constant 0 : index
    %41 = vector.load %arg11[%c6, %c0_24] : memref<18x64xf32, #tpu.memory_space<vmem>>, vector<2x64xf32>
    %42 = vector.broadcast %40 : vector<2x1xf32> to vector<2x64xf32>
    %43 = arith.mulf %42, %41 : vector<2x64xf32>
    %44 = arith.addf %43, %24 : vector<2x64xf32>
    %45 = vector.extract_strided_slice %15 {offsets = [0, 4], sizes = [2, 1], strides = [1, 1]} : vector<2x9xf32> to vector<2x1xf32>
    %c8 = arith.constant 8 : index
    %c0_25 = arith.constant 0 : index
    %46 = vector.load %arg11[%c8, %c0_25] : memref<18x64xf32, #tpu.memory_space<vmem>>, vector<2x64xf32>
    %47 = vector.broadcast %45 : vector<2x1xf32> to vector<2x64xf32>
    %48 = arith.mulf %47, %46 : vector<2x64xf32>
    %49 = arith.addf %48, %24 : vector<2x64xf32>
    %50 = vector.extract_strided_slice %15 {offsets = [0, 5], sizes = [2, 1], strides = [1, 1]} : vector<2x9xf32> to vector<2x1xf32>
    %c10 = arith.constant 10 : index
    %c0_26 = arith.constant 0 : index
    %51 = vector.load %arg11[%c10, %c0_26] : memref<18x64xf32, #tpu.memory_space<vmem>>, vector<2x64xf32>
    %52 = vector.broadcast %50 : vector<2x1xf32> to vector<2x64xf32>
    %53 = arith.mulf %52, %51 : vector<2x64xf32>
    %54 = arith.addf %53, %24 : vector<2x64xf32>
    %55 = vector.extract_strided_slice %15 {offsets = [0, 6], sizes = [2, 1], strides = [1, 1]} : vector<2x9xf32> to vector<2x1xf32>
    %c12 = arith.constant 12 : index
    %c0_27 = arith.constant 0 : index
    %56 = vector.load %arg11[%c12, %c0_27] : memref<18x64xf32, #tpu.memory_space<vmem>>, vector<2x64xf32>
    %57 = vector.broadcast %55 : vector<2x1xf32> to vector<2x64xf32>
    %58 = arith.mulf %57, %56 : vector<2x64xf32>
    %59 = arith.addf %58, %24 : vector<2x64xf32>
    %60 = vector.extract_strided_slice %15 {offsets = [0, 7], sizes = [2, 1], strides = [1, 1]} : vector<2x9xf32> to vector<2x1xf32>
    %c14 = arith.constant 14 : index
    %c0_28 = arith.constant 0 : index
    %61 = vector.load %arg11[%c14, %c0_28] : memref<18x64xf32, #tpu.memory_space<vmem>>, vector<2x64xf32>
    %62 = vector.broadcast %60 : vector<2x1xf32> to vector<2x64xf32>
    %63 = arith.mulf %62, %61 : vector<2x64xf32>
    %64 = arith.addf %63, %24 : vector<2x64xf32>
    %65 = vector.extract_strided_slice %15 {offsets = [0, 8], sizes = [2, 1], strides = [1, 1]} : vector<2x9xf32> to vector<2x1xf32>
    %c16 = arith.constant 16 : index
    %c0_29 = arith.constant 0 : index
    %66 = vector.load %arg11[%c16, %c0_29] : memref<18x64xf32, #tpu.memory_space<vmem>>, vector<2x64xf32>
    %67 = vector.broadcast %65 : vector<2x1xf32> to vector<2x64xf32>
    %68 = arith.mulf %67, %66 : vector<2x64xf32>
    %69 = arith.addf %68, %24 : vector<2x64xf32>
    %cst_30 = arith.constant 0.000000e+00 : f32
    %70 = vector.broadcast %cst_30 : f32 to vector<2x16xf32>
    %cst_31 = arith.constant 0.000000e+00 : f32
    %71 = vector.broadcast %cst_31 : f32 to vector<2x16xf32>
    %cst_32 = arith.constant dense<0.000000e+00> : vector<2x64xf32>
    %72 = tpu.matmul %70, %21, %cst_32 {dimension_numbers = #tpu.dot_dimension_numbers<[1], [0], [0], [1], [0, 0, 1, 1], [], []>} : vector<2x16xf32>, vector<16x64xf32>, vector<2x64xf32> -> vector<2x64xf32>
    %73 = arith.addf %29, %72 : vector<2x64xf32>
    %74 = arith.negf %73 : vector<2x64xf32>
    %75 = math.exp %74 : vector<2x64xf32>
    %cst_33 = arith.constant 1.000000e+00 : f32
    %76 = vector.broadcast %cst_33 : f32 to vector<2x64xf32>
    %77 = arith.addf %76, %75 : vector<2x64xf32>
    %78 = arith.divf %76, %77 : vector<2x64xf32>
    %79 = vector.extract_strided_slice %78 {offsets = [0, 0], sizes = [2, 16], strides = [1, 1]} : vector<2x64xf32> to vector<2x16xf32>
    %80 = vector.extract_strided_slice %78 {offsets = [0, 16], sizes = [2, 16], strides = [1, 1]} : vector<2x64xf32> to vector<2x16xf32>
    %81 = vector.extract_strided_slice %78 {offsets = [0, 48], sizes = [2, 16], strides = [1, 1]} : vector<2x64xf32> to vector<2x16xf32>
    %82 = vector.extract_strided_slice %73 {offsets = [0, 32], sizes = [2, 16], strides = [1, 1]} : vector<2x64xf32> to vector<2x16xf32>
    %83 = math.tanh %82 : vector<2x16xf32>
    %84 = arith.mulf %80, %71 : vector<2x16xf32>
    %85 = arith.mulf %79, %83 : vector<2x16xf32>
    %86 = arith.addf %84, %85 : vector<2x16xf32>
    %87 = math.tanh %86 : vector<2x16xf32>
    %88 = arith.mulf %81, %87 : vector<2x16xf32>
    %c0_34 = arith.constant 0 : index
    %c0_35 = arith.constant 0 : index
    %89 = vector.load %arg12[%c0_34, %c0_35] : memref<2x144xf32, #tpu.memory_space<vmem>>, vector<2x16xf32>
    tpu.vector_store %arg12[%c0_34, %c0_35], %88 {strides = array<i32>} : memref<2x144xf32, #tpu.memory_space<vmem>>, vector<2x16xf32>,
    %cst_36 = arith.constant dense<0.000000e+00> : vector<2x64xf32>
    %90 = tpu.matmul %88, %21, %cst_36 {dimension_numbers = #tpu.dot_dimension_numbers<[1], [0], [0], [1], [0, 0, 1, 1], [], []>} : vector<2x16xf32>, vector<16x64xf32>, vector<2x64xf32> -> vector<2x64xf32>
    %91 = arith.addf %34, %90 : vector<2x64xf32>
    %92 = arith.negf %91 : vector<2x64xf32>
    %93 = math.exp %92 : vector<2x64xf32>
    %cst_37 = arith.constant 1.000000e+00 : f32
    %94 = vector.broadcast %cst_37 : f32 to vector<2x64xf32>
    %95 = arith.addf %94, %93 : vector<2x64xf32>
    %96 = arith.divf %94, %95 : vector<2x64xf32>
    %97 = vector.extract_strided_slice %96 {offsets = [0, 0], sizes = [2, 16], strides = [1, 1]} : vector<2x64xf32> to vector<2x16xf32>
    %98 = vector.extract_strided_slice %96 {offsets = [0, 16], sizes = [2, 16], strides = [1, 1]} : vector<2x64xf32> to vector<2x16xf32>
    %99 = vector.extract_strided_slice %96 {offsets = [0, 48], sizes = [2, 16], strides = [1, 1]} : vector<2x64xf32> to vector<2x16xf32>
    %100 = vector.extract_strided_slice %91 {offsets = [0, 32], sizes = [2, 16], strides = [1, 1]} : vector<2x64xf32> to vector<2x16xf32>
    %101 = math.tanh %100 : vector<2x16xf32>
    %102 = arith.mulf %98, %86 : vector<2x16xf32>
    %103 = arith.mulf %97, %101 : vector<2x16xf32>
    %104 = arith.addf %102, %103 : vector<2x16xf32>
    %105 = math.tanh %104 : vector<2x16xf32>
    %106 = arith.mulf %99, %105 : vector<2x16xf32>
    %c0_38 = arith.constant 0 : index
    %c16_39 = arith.constant 16 : index
    %107 = vector.load %arg12[%c0_38, %c16_39] : memref<2x144xf32, #tpu.memory_space<vmem>>, vector<2x16xf32>
    tpu.vector_store %arg12[%c0_38, %c16_39], %106 {strides = array<i32>} : memref<2x144xf32, #tpu.memory_space<vmem>>, vector<2x16xf32>,
    %cst_40 = arith.constant dense<0.000000e+00> : vector<2x64xf32>
    %108 = tpu.matmul %106, %21, %cst_40 {dimension_numbers = #tpu.dot_dimension_numbers<[1], [0], [0], [1], [0, 0, 1, 1], [], []>} : vector<2x16xf32>, vector<16x64xf32>, vector<2x64xf32> -> vector<2x64xf32>
    %109 = arith.addf %39, %108 : vector<2x64xf32>
    %110 = arith.negf %109 : vector<2x64xf32>
    %111 = math.exp %110 : vector<2x64xf32>
    %cst_41 = arith.constant 1.000000e+00 : f32
    %112 = vector.broadcast %cst_41 : f32 to vector<2x64xf32>
    %113 = arith.addf %112, %111 : vector<2x64xf32>
    %114 = arith.divf %112, %113 : vector<2x64xf32>
    %115 = vector.extract_strided_slice %114 {offsets = [0, 0], sizes = [2, 16], strides = [1, 1]} : vector<2x64xf32> to vector<2x16xf32>
    %116 = vector.extract_strided_slice %114 {offsets = [0, 16], sizes = [2, 16], strides = [1, 1]} : vector<2x64xf32> to vector<2x16xf32>
    %117 = vector.extract_strided_slice %114 {offsets = [0, 48], sizes = [2, 16], strides = [1, 1]} : vector<2x64xf32> to vector<2x16xf32>
    %118 = vector.extract_strided_slice %109 {offsets = [0, 32], sizes = [2, 16], strides = [1, 1]} : vector<2x64xf32> to vector<2x16xf32>
    %119 = math.tanh %118 : vector<2x16xf32>
    %120 = arith.mulf %116, %104 : vector<2x16xf32>
    %121 = arith.mulf %115, %119 : vector<2x16xf32>
    %122 = arith.addf %120, %121 : vector<2x16xf32>
    %123 = math.tanh %122 : vector<2x16xf32>
    %124 = arith.mulf %117, %123 : vector<2x16xf32>
    %c0_42 = arith.constant 0 : index
    %c32 = arith.constant 32 : index
    %125 = vector.load %arg12[%c0_42, %c32] : memref<2x144xf32, #tpu.memory_space<vmem>>, vector<2x16xf32>
    tpu.vector_store %arg12[%c0_42, %c32], %124 {strides = array<i32>} : memref<2x144xf32, #tpu.memory_space<vmem>>, vector<2x16xf32>,
    %cst_43 = arith.constant dense<0.000000e+00> : vector<2x64xf32>
    %126 = tpu.matmul %124, %21, %cst_43 {dimension_numbers = #tpu.dot_dimension_numbers<[1], [0], [0], [1], [0, 0, 1, 1], [], []>} : vector<2x16xf32>, vector<16x64xf32>, vector<2x64xf32> -> vector<2x64xf32>
    %127 = arith.addf %44, %126 : vector<2x64xf32>
    %128 = arith.negf %127 : vector<2x64xf32>
    %129 = math.exp %128 : vector<2x64xf32>
    %cst_44 = arith.constant 1.000000e+00 : f32
    %130 = vector.broadcast %cst_44 : f32 to vector<2x64xf32>
    %131 = arith.addf %130, %129 : vector<2x64xf32>
    %132 = arith.divf %130, %131 : vector<2x64xf32>
    %133 = vector.extract_strided_slice %132 {offsets = [0, 0], sizes = [2, 16], strides = [1, 1]} : vector<2x64xf32> to vector<2x16xf32>
    %134 = vector.extract_strided_slice %132 {offsets = [0, 16], sizes = [2, 16], strides = [1, 1]} : vector<2x64xf32> to vector<2x16xf32>
    %135 = vector.extract_strided_slice %132 {offsets = [0, 48], sizes = [2, 16], strides = [1, 1]} : vector<2x64xf32> to vector<2x16xf32>
    %136 = vector.extract_strided_slice %127 {offsets = [0, 32], sizes = [2, 16], strides = [1, 1]} : vector<2x64xf32> to vector<2x16xf32>
    %137 = math.tanh %136 : vector<2x16xf32>
    %138 = arith.mulf %134, %122 : vector<2x16xf32>
    %139 = arith.mulf %133, %137 : vector<2x16xf32>
    %140 = arith.addf %138, %139 : vector<2x16xf32>
    %141 = math.tanh %140 : vector<2x16xf32>
    %142 = arith.mulf %135, %141 : vector<2x16xf32>
    %c0_45 = arith.constant 0 : index
    %c48 = arith.constant 48 : index
    %143 = vector.load %arg12[%c0_45, %c48] : memref<2x144xf32, #tpu.memory_space<vmem>>, vector<2x16xf32>
    tpu.vector_store %arg12[%c0_45, %c48], %142 {strides = array<i32>} : memref<2x144xf32, #tpu.memory_space<vmem>>, vector<2x16xf32>,
    %cst_46 = arith.constant dense<0.000000e+00> : vector<2x64xf32>
    %144 = tpu.matmul %142, %21, %cst_46 {dimension_numbers = #tpu.dot_dimension_numbers<[1], [0], [0], [1], [0, 0, 1, 1], [], []>} : vector<2x16xf32>, vector<16x64xf32>, vector<2x64xf32> -> vector<2x64xf32>
    %145 = arith.addf %49, %144 : vector<2x64xf32>
    %146 = arith.negf %145 : vector<2x64xf32>
    %147 = math.exp %146 : vector<2x64xf32>
    %cst_47 = arith.constant 1.000000e+00 : f32
    %148 = vector.broadcast %cst_47 : f32 to vector<2x64xf32>
    %149 = arith.addf %148, %147 : vector<2x64xf32>
    %150 = arith.divf %148, %149 : vector<2x64xf32>
    %151 = vector.extract_strided_slice %150 {offsets = [0, 0], sizes = [2, 16], strides = [1, 1]} : vector<2x64xf32> to vector<2x16xf32>
    %152 = vector.extract_strided_slice %150 {offsets = [0, 16], sizes = [2, 16], strides = [1, 1]} : vector<2x64xf32> to vector<2x16xf32>
    %153 = vector.extract_strided_slice %150 {offsets = [0, 48], sizes = [2, 16], strides = [1, 1]} : vector<2x64xf32> to vector<2x16xf32>
    %154 = vector.extract_strided_slice %145 {offsets = [0, 32], sizes = [2, 16], strides = [1, 1]} : vector<2x64xf32> to vector<2x16xf32>
    %155 = math.tanh %154 : vector<2x16xf32>
    %156 = arith.mulf %152, %140 : vector<2x16xf32>
    %157 = arith.mulf %151, %155 : vector<2x16xf32>
    %158 = arith.addf %156, %157 : vector<2x16xf32>
    %159 = math.tanh %158 : vector<2x16xf32>
    %160 = arith.mulf %153, %159 : vector<2x16xf32>
    %c0_48 = arith.constant 0 : index
    %c64 = arith.constant 64 : index
    %161 = vector.load %arg12[%c0_48, %c64] : memref<2x144xf32, #tpu.memory_space<vmem>>, vector<2x16xf32>
    tpu.vector_store %arg12[%c0_48, %c64], %160 {strides = array<i32>} : memref<2x144xf32, #tpu.memory_space<vmem>>, vector<2x16xf32>,
    %cst_49 = arith.constant dense<0.000000e+00> : vector<2x64xf32>
    %162 = tpu.matmul %160, %21, %cst_49 {dimension_numbers = #tpu.dot_dimension_numbers<[1], [0], [0], [1], [0, 0, 1, 1], [], []>} : vector<2x16xf32>, vector<16x64xf32>, vector<2x64xf32> -> vector<2x64xf32>
    %163 = arith.addf %54, %162 : vector<2x64xf32>
    %164 = arith.negf %163 : vector<2x64xf32>
    %165 = math.exp %164 : vector<2x64xf32>
    %cst_50 = arith.constant 1.000000e+00 : f32
    %166 = vector.broadcast %cst_50 : f32 to vector<2x64xf32>
    %167 = arith.addf %166, %165 : vector<2x64xf32>
    %168 = arith.divf %166, %167 : vector<2x64xf32>
    %169 = vector.extract_strided_slice %168 {offsets = [0, 0], sizes = [2, 16], strides = [1, 1]} : vector<2x64xf32> to vector<2x16xf32>
    %170 = vector.extract_strided_slice %168 {offsets = [0, 16], sizes = [2, 16], strides = [1, 1]} : vector<2x64xf32> to vector<2x16xf32>
    %171 = vector.extract_strided_slice %168 {offsets = [0, 48], sizes = [2, 16], strides = [1, 1]} : vector<2x64xf32> to vector<2x16xf32>
    %172 = vector.extract_strided_slice %163 {offsets = [0, 32], sizes = [2, 16], strides = [1, 1]} : vector<2x64xf32> to vector<2x16xf32>
    %173 = math.tanh %172 : vector<2x16xf32>
    %174 = arith.mulf %170, %158 : vector<2x16xf32>
    %175 = arith.mulf %169, %173 : vector<2x16xf32>
    %176 = arith.addf %174, %175 : vector<2x16xf32>
    %177 = math.tanh %176 : vector<2x16xf32>
    %178 = arith.mulf %171, %177 : vector<2x16xf32>
    %c0_51 = arith.constant 0 : index
    %c80 = arith.constant 80 : index
    %179 = vector.load %arg12[%c0_51, %c80] : memref<2x144xf32, #tpu.memory_space<vmem>>, vector<2x16xf32>
    tpu.vector_store %arg12[%c0_51, %c80], %178 {strides = array<i32>} : memref<2x144xf32, #tpu.memory_space<vmem>>, vector<2x16xf32>,
    %cst_52 = arith.constant dense<0.000000e+00> : vector<2x64xf32>
    %180 = tpu.matmul %178, %21, %cst_52 {dimension_numbers = #tpu.dot_dimension_numbers<[1], [0], [0], [1], [0, 0, 1, 1], [], []>} : vector<2x16xf32>, vector<16x64xf32>, vector<2x64xf32> -> vector<2x64xf32>
    %181 = arith.addf %59, %180 : vector<2x64xf32>
    %182 = arith.negf %181 : vector<2x64xf32>
    %183 = math.exp %182 : vector<2x64xf32>
    %cst_53 = arith.constant 1.000000e+00 : f32
    %184 = vector.broadcast %cst_53 : f32 to vector<2x64xf32>
    %185 = arith.addf %184, %183 : vector<2x64xf32>
    %186 = arith.divf %184, %185 : vector<2x64xf32>
    %187 = vector.extract_strided_slice %186 {offsets = [0, 0], sizes = [2, 16], strides = [1, 1]} : vector<2x64xf32> to vector<2x16xf32>
    %188 = vector.extract_strided_slice %186 {offsets = [0, 16], sizes = [2, 16], strides = [1, 1]} : vector<2x64xf32> to vector<2x16xf32>
    %189 = vector.extract_strided_slice %186 {offsets = [0, 48], sizes = [2, 16], strides = [1, 1]} : vector<2x64xf32> to vector<2x16xf32>
    %190 = vector.extract_strided_slice %181 {offsets = [0, 32], sizes = [2, 16], strides = [1, 1]} : vector<2x64xf32> to vector<2x16xf32>
    %191 = math.tanh %190 : vector<2x16xf32>
    %192 = arith.mulf %188, %176 : vector<2x16xf32>
    %193 = arith.mulf %187, %191 : vector<2x16xf32>
    %194 = arith.addf %192, %193 : vector<2x16xf32>
    %195 = math.tanh %194 : vector<2x16xf32>
    %196 = arith.mulf %189, %195 : vector<2x16xf32>
    %c0_54 = arith.constant 0 : index
    %c96 = arith.constant 96 : index
    %197 = vector.load %arg12[%c0_54, %c96] : memref<2x144xf32, #tpu.memory_space<vmem>>, vector<2x16xf32>
    tpu.vector_store %arg12[%c0_54, %c96], %196 {strides = array<i32>} : memref<2x144xf32, #tpu.memory_space<vmem>>, vector<2x16xf32>,
    %cst_55 = arith.constant dense<0.000000e+00> : vector<2x64xf32>
    %198 = tpu.matmul %196, %21, %cst_55 {dimension_numbers = #tpu.dot_dimension_numbers<[1], [0], [0], [1], [0, 0, 1, 1], [], []>} : vector<2x16xf32>, vector<16x64xf32>, vector<2x64xf32> -> vector<2x64xf32>
    %199 = arith.addf %64, %198 : vector<2x64xf32>
    %200 = arith.negf %199 : vector<2x64xf32>
    %201 = math.exp %200 : vector<2x64xf32>
    %cst_56 = arith.constant 1.000000e+00 : f32
    %202 = vector.broadcast %cst_56 : f32 to vector<2x64xf32>
    %203 = arith.addf %202, %201 : vector<2x64xf32>
    %204 = arith.divf %202, %203 : vector<2x64xf32>
    %205 = vector.extract_strided_slice %204 {offsets = [0, 0], sizes = [2, 16], strides = [1, 1]} : vector<2x64xf32> to vector<2x16xf32>
    %206 = vector.extract_strided_slice %204 {offsets = [0, 16], sizes = [2, 16], strides = [1, 1]} : vector<2x64xf32> to vector<2x16xf32>
    %207 = vector.extract_strided_slice %204 {offsets = [0, 48], sizes = [2, 16], strides = [1, 1]} : vector<2x64xf32> to vector<2x16xf32>
    %208 = vector.extract_strided_slice %199 {offsets = [0, 32], sizes = [2, 16], strides = [1, 1]} : vector<2x64xf32> to vector<2x16xf32>
    %209 = math.tanh %208 : vector<2x16xf32>
    %210 = arith.mulf %206, %194 : vector<2x16xf32>
    %211 = arith.mulf %205, %209 : vector<2x16xf32>
    %212 = arith.addf %210, %211 : vector<2x16xf32>
    %213 = math.tanh %212 : vector<2x16xf32>
    %214 = arith.mulf %207, %213 : vector<2x16xf32>
    %c0_57 = arith.constant 0 : index
    %c112 = arith.constant 112 : index
    %215 = vector.load %arg12[%c0_57, %c112] : memref<2x144xf32, #tpu.memory_space<vmem>>, vector<2x16xf32>
    tpu.vector_store %arg12[%c0_57, %c112], %214 {strides = array<i32>} : memref<2x144xf32, #tpu.memory_space<vmem>>, vector<2x16xf32>,
    %cst_58 = arith.constant dense<0.000000e+00> : vector<2x64xf32>
    %216 = tpu.matmul %214, %21, %cst_58 {dimension_numbers = #tpu.dot_dimension_numbers<[1], [0], [0], [1], [0, 0, 1, 1], [], []>} : vector<2x16xf32>, vector<16x64xf32>, vector<2x64xf32> -> vector<2x64xf32>
    %217 = arith.addf %69, %216 : vector<2x64xf32>
    %218 = arith.negf %217 : vector<2x64xf32>
    %219 = math.exp %218 : vector<2x64xf32>
    %cst_59 = arith.constant 1.000000e+00 : f32
    %220 = vector.broadcast %cst_59 : f32 to vector<2x64xf32>
    %221 = arith.addf %220, %219 : vector<2x64xf32>
    %222 = arith.divf %220, %221 : vector<2x64xf32>
    %223 = vector.extract_strided_slice %222 {offsets = [0, 0], sizes = [2, 16], strides = [1, 1]} : vector<2x64xf32> to vector<2x16xf32>
    %224 = vector.extract_strided_slice %222 {offsets = [0, 16], sizes = [2, 16], strides = [1, 1]} : vector<2x64xf32> to vector<2x16xf32>
    %225 = vector.extract_strided_slice %222 {offsets = [0, 48], sizes = [2, 16], strides = [1, 1]} : vector<2x64xf32> to vector<2x16xf32>
    %226 = vector.extract_strided_slice %217 {offsets = [0, 32], sizes = [2, 16], strides = [1, 1]} : vector<2x64xf32> to vector<2x16xf32>
    %227 = math.tanh %226 : vector<2x16xf32>
    %228 = arith.mulf %224, %212 : vector<2x16xf32>
    %229 = arith.mulf %223, %227 : vector<2x16xf32>
    %230 = arith.addf %228, %229 : vector<2x16xf32>
    %231 = math.tanh %230 : vector<2x16xf32>
    %232 = arith.mulf %225, %231 : vector<2x16xf32>
    %c0_60 = arith.constant 0 : index
    %c128 = arith.constant 128 : index
    %233 = vector.load %arg12[%c0_60, %c128] : memref<2x144xf32, #tpu.memory_space<vmem>>, vector<2x16xf32>
    tpu.vector_store %arg12[%c0_60, %c128], %232 {strides = array<i32>} : memref<2x144xf32, #tpu.memory_space<vmem>>, vector<2x16xf32>,
    %c0_61 = arith.constant 0 : index
    %c0_62 = arith.constant 0 : index
    %234 = vector.load %arg12[%c0_61, %c0_62] : memref<2x144xf32, #tpu.memory_space<vmem>>, vector<2x144xf32>
    %c0_63 = arith.constant 0 : index
    %c0_64 = arith.constant 0 : index
    %235 = vector.load %arg7[%c0_63, %c0_64] : memref<144x2xf32, #tpu.memory_space<vmem>>, vector<144x2xf32>
    %cst_65 = arith.constant dense<0.000000e+00> : vector<2x2xf32>
    %236 = tpu.matmul %234, %235, %cst_65 {dimension_numbers = #tpu.dot_dimension_numbers<[1], [0], [0], [1], [0, 0, 1, 1], [], []>} : vector<2x144xf32>, vector<144x2xf32>, vector<2x2xf32> -> vector<2x2xf32>
    %c0_66 = arith.constant 0 : index
    %c0_67 = arith.constant 0 : index
    %237 = vector.load %arg8[%c0_66, %c0_67] : memref<1x2xf32, #tpu.memory_space<vmem>>, vector<1x2xf32>
    %238 = vector.broadcast %237 : vector<1x2xf32> to vector<2x2xf32>
    %239 = arith.addf %236, %238 : vector<2x2xf32>
    %c0_68 = arith.constant 0 : index
    %c0_69 = arith.constant 0 : index
    %240 = vector.load %arg9[%c0_68, %c0_69] : memref<2x2xf32, #tpu.memory_space<vmem>>, vector<2x2xf32>
    tpu.vector_store %arg9[%c0_68, %c0_69], %239 {strides = array<i32>} : memref<2x2xf32, #tpu.memory_space<vmem>>, vector<2x2xf32>,
    return
  }
}

</mosaic_0001>

<llo_original>
// kernel: simp_att_input_forward.1
$region0: #{simp_att_input_forward.1}
  #allocation0 [shape = 'u32[]', space=smem, size = 0x4, offset = 0x4, fixed_abs, tag = 'smem constant byte address 0x4 - core index']
  #allocation1 [shape = 'u32[144,128]{1,0:T(1,128)}', space=vmem, size = 0x12000, scoped, tag = 'internal scratch']
  #allocation2 [shape = 'f32[18,64]{1,0:T(8,128)}', space=vmem, size = 0x3000, scoped, tag = 'scratch operand']
  #allocation3 [shape = 'f32[2,144]{1,0:T(2,128)}', space=vmem, size = 0x800, scoped, tag = 'scratch operand']
  #allocation4 [shape = 'f32[1,1]{1,0:T(1,128)S(1)}', space=vmem, size = 0x200, scoped, tag = 'scoped memory for simp_att_input_forward.1']
  %s0 = inlined_call_operand.vmem [shape: f32[18,4], index: 0, kind: input, shape index: {}]
  %s1 = inlined_call_operand.vmem [shape: f32[2,36], index: 1, kind: input, shape index: {}]
  %s2 = inlined_call_operand.vmem [shape: f32[36,9], index: 2, kind: input, shape index: {}]
  %s3 = inlined_call_operand.<no memory space> [shape: f32[1,1], index: 3, kind: input, shape index: {}]
  %s4 = inlined_call_operand.vmem [shape: f32[4,64], index: 4, kind: input, shape index: {}]
  %s5 = inlined_call_operand.vmem [shape: f32[16,64], index: 5, kind: input, shape index: {}]
  %s6 = inlined_call_operand.vmem [shape: f32[1,64], index: 6, kind: input, shape index: {}]
  %s7 = inlined_call_operand.vmem [shape: f32[144,2], index: 7, kind: input, shape index: {}]
  %s8 = inlined_call_operand.vmem [shape: f32[1,2], index: 8, kind: input, shape index: {}]
  %s9 = inlined_call_operand.hbm [shape: f32[2,2], index: 9, kind: output, shape index: {0}]
  %s10 = inlined_call_operand.hbm [shape: f32[2,9], index: 10, kind: output, shape index: {1}]
  %11 = xla_tuple %s9, %s10
  %s12 = sld [smem:[#allocation0]]
  $region54: #{simp_att_input_forward.1} parent=0
    _
  %s14 = ssub.s32 1, %s12
  %s15 = scalar_select 0, %s14, %s12
  %v16 = vstv %s3
  %17 = vst [vmem:[#allocation4] sm:$0x1] %v16
  $region1: #{simp_att_input_forward.1} parent=0
    #allocation5 [shape = 'u8[1024]{0}', space=vmem, size = 0x400, scoped, tag = 'output window, operand 0, single buffered']
    #allocation6 [shape = 's32[1]{0}', space=sflag, size = 0x4, scoped, tag = 'scoped memory for simp_att_input_forward.1']
    #allocation7 [shape = 'u8[1024]{0}', space=vmem, size = 0x400, scoped, tag = 'output window, operand 1, single buffered']
    #allocation8 [shape = 's32[1]{0}', space=sflag, size = 0x4, scoped, tag = 'scoped memory for simp_att_input_forward.1']
    %18 = vsyncpa [#allocation6], 0
    %19 = vsyncpa [#allocation8], 0
    // Predicated region
    $region2: #{simp_att_input_forward.1} parent=1 // pred_check
      _
    $region3: #{simp_att_input_forward.1} parent=1 // pred_check_branch
      %21 = sbr.rel (0) target = $region5
    $region4: #{simp_att_input_forward.1} parent=1 // pred_region
      _
    $region5: #{simp_att_input_forward.1} parent=1 // pred_fallthru
      _
    // Predicated region
    $region6: #{simp_att_input_forward.1} parent=1 // pred_check
      _
    $region7: #{simp_att_input_forward.1} parent=1 // pred_check_branch
      %23 = sbr.rel (0) target = $region9
    $region8: #{simp_att_input_forward.1} parent=1 // pred_region
      _
    $region9: #{simp_att_input_forward.1} parent=1 // pred_fallthru
      _
    // Predicated region
    $region10: #{simp_att_input_forward.1} parent=1 // pred_check
      _
    $region11: #{simp_att_input_forward.1} parent=1 // pred_check_branch
      %25 = sbr.rel (0) target = $region13
    $region12: #{simp_att_input_forward.1} parent=1 // pred_region
      _
    $region13: #{simp_att_input_forward.1} parent=1 // pred_fallthru
      _
    // Predicated region
    $region14: #{simp_att_input_forward.1} parent=1 // pred_check
      _
    $region15: #{simp_att_input_forward.1} parent=1 // pred_check_branch
      %27 = sbr.rel (0) target = $region17
    $region16: #{simp_att_input_forward.1} parent=1 // pred_region
      _
    $region17: #{simp_att_input_forward.1} parent=1 // pred_fallthru
      _
    // Predicated region
    $region18: #{simp_att_input_forward.1} parent=1 // pred_check
      _
    $region19: #{simp_att_input_forward.1} parent=1 // pred_check_branch
      %29 = sbr.rel (0) target = $region21
    $region20: #{simp_att_input_forward.1} parent=1 // pred_region
      _
    $region21: #{simp_att_input_forward.1} parent=1 // pred_fallthru
      _
    // Predicated region
    $region22: #{simp_att_input_forward.1} parent=1 // pred_check
      _
    $region23: #{simp_att_input_forward.1} parent=1 // pred_check_branch
      %31 = sbr.rel (0) target = $region25
    $region24: #{simp_att_input_forward.1} parent=1 // pred_region
      _
    $region25: #{simp_att_input_forward.1} parent=1 // pred_fallthru
      _
    // Predicated region
    $region26: #{simp_att_input_forward.1} parent=1 // pred_check
      _
    $region27: #{simp_att_input_forward.1} parent=1 // pred_check_branch
      %33 = sbr.rel (0) target = $region29
    $region28: #{simp_att_input_forward.1} parent=1 // pred_region
      _
    $region29: #{simp_att_input_forward.1} parent=1 // pred_fallthru
      _
    // Predicated region
    $region30: #{simp_att_input_forward.1} parent=1 // pred_check
      _
    $region31: #{simp_att_input_forward.1} parent=1 // pred_check_branch
      %35 = sbr.rel (0) target = $region33
    $region32: #{simp_att_input_forward.1} parent=1 // pred_region
      _
    $region33: #{simp_att_input_forward.1} parent=1 // pred_fallthru
      _
    // Predicated region
    $region34: #{simp_att_input_forward.1} parent=1 // pred_check
      _
    $region35: #{simp_att_input_forward.1} parent=1 // pred_check_branch
      %37 = sbr.rel (0) target = $region37
    $region36: #{simp_att_input_forward.1} parent=1 // pred_region
      _
    $region37: #{simp_att_input_forward.1} parent=1 // pred_fallthru
      _
    %v38 = vld [vmem:[%s1] sm:$0x3]
    %v39 = vld [vmem:[%s2] sm:$0xff]
    %v40 = vld [vmem:[%s2 + $0x8] sm:$0xff]
    %v41 = vld [vmem:[%s2 + $0x10] sm:$0xff]
    %v42 = vld [vmem:[%s2 + $0x18] sm:$0xff]
    %v43 = vld [vmem:[%s2 + $0x20] sm:$0xf]
    %v44 = vld [vmem:[#allocation4] sm:$0x1]
    %v46 = vlaneseq
    %v47 = vshrl.u32 %v46, 7
    %v48 = vsub.s32 0, %v47
    %v49 = vrot.slane %v44, %v48
    %50 = vset.pattern.permute.xlu0 0
    %51 = vperm.xlu0 %50, %v49
    %v52 = vpop.permute.xlu0 %51
    %vm54 = vcmask 293888
    %v56 = vsel %vm54, %v38, 0
    %vm58 = vcmask 1043456
    %v60 = vsel %vm58, %v43, 0
    %62 = vmatprep.subr.mxu0 0.0
    %63 = vmatpush1.msra.mxu0 %v39
    %64 = vmatprep.subr.mxu0 0.0
    %65 = vmatpush1.msra.mxu0 %v40
    %66 = vmatprep.subr.mxu0 0.0
    %67 = vmatpush1.msra.mxu0 %v41
    %68 = vmatprep.subr.mxu0 0.0
    %69 = vmatpush1.msra.mxu0 %v42
    %70 = vmatprep.subr.mxu0 0.0
    %71 = vmatpush1.msra.mxu0 %v60
    %72 = vmatprep.subr.mxu0 0.0
    %73 = vmatpush1.msra.mxu0 0.0
    %74 = vmatprep.subr.mxu0 0.0
    %75 = vmatpush1.msra.mxu0 0.0
    %76 = vmatprep.subr.mxu0 0.0
    %77 = vmatpush1.msra.mxu0 0.0
    %78 = vmatprep.subr.mxu0 0.0
    %79 = vmatpush1.msra.mxu0 0.0
    %80 = vmatprep.subr.mxu0 0.0
    %81 = vmatpush1.msra.mxu0 0.0
    %82 = vmatprep.subr.mxu0 0.0
    %83 = vmatpush1.msra.mxu0 0.0
    %84 = vmatprep.subr.mxu0 0.0
    %85 = vmatpush1.msra.mxu0 0.0
    %86 = vmatprep.subr.mxu0 0.0
    %87 = vmatpush1.msra.mxu0 0.0
    %88 = vmatprep.subr.mxu0 0.0
    %89 = vmatpush1.msra.mxu0 0.0
    %90 = vmatprep.subr.mxu0 0.0
    %91 = vmatpush1.msra.mxu0 0.0
    %92 = vmatprep.subr.mxu0 0.0
    %93 = vmatpush1.msra.mxu0 0.0
    %94 = vmatprep.subr.mxu0 0.0
    %95 = vmatpush1.msra.mxu0 0.0
    %96 = vmatprep.subr.mxu0 0.0
    %97 = vmatpush1.msra.mxu0 0.0
    %98 = vmatprep.subr.mxu0 0.0
    %99 = vmatpush1.msra.mxu0 0.0
    %100 = vmatprep.subr.mxu0 0.0
    %101 = vmatpush1.msra.mxu0 0.0
    %102 = vmatprep.subr.mxu0 0.0
    %103 = vmatpush1.msra.mxu0 0.0
    %104 = vmatprep.subr.mxu0 0.0
    %105 = vmatpush1.msra.mxu0 0.0
    %106 = vmatprep.subr.mxu0 0.0
    %107 = vmatpush1.msra.mxu0 0.0
    %108 = vmatprep.subr.mxu0 0.0
    %109 = vmatpush1.msra.mxu0 0.0
    %110 = vmatprep.subr.mxu0 0.0
    %111 = vmatpush1.msra.mxu0 0.0
    %112 = vmatprep.subr.mxu0 0.0
    %113 = vmatpush1.msra.mxu0 0.0
    %114 = vmatprep.subr.mxu0 0.0
    %115 = vmatpush1.msra.mxu0 0.0
    %116 = vmatprep.subr.mxu0 0.0
    %117 = vmatpush1.msra.mxu0 0.0
    %118 = vmatprep.subr.mxu0 0.0
    %119 = vmatpush1.msra.mxu0 0.0
    %120 = vmatprep.subr.mxu0 0.0
    %121 = vmatpush1.msra.mxu0 0.0
    %122 = vmatprep.subr.mxu0 0.0
    %123 = vmatpush1.msra.mxu0 0.0
    %124 = vmatprep.subr.mxu0 0.0
    %125 = vmatpush1.msra.mxu0 0.0
    %126 = vmatprep.mubr.f32.mxu0 0.0
    %127 = vmatmul.mubr.f32.gmra.mrb[0].mxu0 %v56
    %v128 = vpop.f32.mrb[0].mxu0
    %v129 = vadd.f32 %v52, %v128
    %v130 = vpop.f32.mrb[0].mxu0
    %131 = vdwg.mxu0
    %v132 = vtanh.pop %v129
    %vm133 = vcmask 66560
    %v134 = vsel %vm133, %v132, -inf
    %135 = vmax.xlane.f32.xlu0 %v134
    %v136 = vpop.xlane.xlu0 %135
    %v137 = vsub.f32 %v132, %v136
    %v138 = vmul.f32 %v137, 1.442695
    %v139 = vpow.pop %v138
    %v140 = vsel %vm133, %v139, 0.0
    %141 = vadd.xlane.f32.xlu0 %v140
    %v142 = vpop.xlane.xlu0 %141
    %v143 = vrcp.pop %v142
    %v144 = vmul.f32 %v139, %v143
    %145 = vst.msk [vmem:[#allocation7] sm:$0x3] %vm133, %v144
    %v146 = vld [vmem:[%s0] sm:$0xff]
    %v147 = vld [vmem:[%s0 + $0x8] sm:$0xff]
    %v148 = vld [vmem:[%s0 + $0x10] sm:$0x3]
    %v149 = vld [vmem:[%s4] sm:$0xf]
    %vm150 = vcmask 31744
    %v152 = vsel %vm150, %v146, 0
    %v155 = vsel %vm150, %v147, 0
    %v158 = vsel %vm150, %v148, 0
    %v161 = vsel %vm58, %v149, 0
    %163 = vmatprep.subr.mxu0 0.0
    %164 = vmatpush1.msra.mxu0 %v161
    %165 = vmatprep.subr.mxu0 0.0
    %166 = vmatpush1.msra.mxu0 0.0
    %167 = vmatprep.subr.mxu0 0.0
    %168 = vmatpush1.msra.mxu0 0.0
    %169 = vmatprep.subr.mxu0 0.0
    %170 = vmatpush1.msra.mxu0 0.0
    %171 = vmatprep.subr.mxu0 0.0
    %172 = vmatpush1.msra.mxu0 0.0
    %173 = vmatprep.subr.mxu0 0.0
    %174 = vmatpush1.msra.mxu0 0.0
    %175 = vmatprep.subr.mxu0 0.0
    %176 = vmatpush1.msra.mxu0 0.0
    %177 = vmatprep.subr.mxu0 0.0
    %178 = vmatpush1.msra.mxu0 0.0
    %179 = vmatprep.subr.mxu0 0.0
    %180 = vmatpush1.msra.mxu0 0.0
    %181 = vmatprep.subr.mxu0 0.0
    %182 = vmatpush1.msra.mxu0 0.0
    %183 = vmatprep.subr.mxu0 0.0
    %184 = vmatpush1.msra.mxu0 0.0
    %185 = vmatprep.subr.mxu0 0.0
    %186 = vmatpush1.msra.mxu0 0.0
    %187 = vmatprep.subr.mxu0 0.0
    %188 = vmatpush1.msra.mxu0 0.0
    %189 = vmatprep.subr.mxu0 0.0
    %190 = vmatpush1.msra.mxu0 0.0
    %191 = vmatprep.subr.mxu0 0.0
    %192 = vmatpush1.msra.mxu0 0.0
    %193 = vmatprep.subr.mxu0 0.0
    %194 = vmatpush1.msra.mxu0 0.0
    %195 = vmatprep.subr.mxu0 0.0
    %196 = vmatpush1.msra.mxu0 0.0
    %197 = vmatprep.subr.mxu0 0.0
    %198 = vmatpush1.msra.mxu0 0.0
    %199 = vmatprep.subr.mxu0 0.0
    %200 = vmatpush1.msra.mxu0 0.0
    %201 = vmatprep.subr.mxu0 0.0
    %202 = vmatpush1.msra.mxu0 0.0
    %203 = vmatprep.subr.mxu0 0.0
    %204 = vmatpush1.msra.mxu0 0.0
    %205 = vmatprep.subr.mxu0 0.0
    %206 = vmatpush1.msra.mxu0 0.0
    %207 = vmatprep.subr.mxu0 0.0
    %208 = vmatpush1.msra.mxu0 0.0
    %209 = vmatprep.subr.mxu0 0.0
    %210 = vmatpush1.msra.mxu0 0.0
    %211 = vmatprep.subr.mxu0 0.0
    %212 = vmatpush1.msra.mxu0 0.0
    %213 = vmatprep.subr.mxu0 0.0
    %214 = vmatpush1.msra.mxu0 0.0
    %215 = vmatprep.subr.mxu0 0.0
    %216 = vmatpush1.msra.mxu0 0.0
    %217 = vmatprep.subr.mxu0 0.0
    %218 = vmatpush1.msra.mxu0 0.0
    %219 = vmatprep.subr.mxu0 0.0
    %220 = vmatpush1.msra.mxu0 0.0
    %221 = vmatprep.subr.mxu0 0.0
    %222 = vmatpush1.msra.mxu0 0.0
    %223 = vmatprep.subr.mxu0 0.0
    %224 = vmatpush1.msra.mxu0 0.0
    %225 = vmatprep.subr.mxu0 0.0
    %226 = vmatpush1.msra.mxu0 0.0
    %227 = vmatprep.mubr.f32.mxu0 0.0
    %228 = vmatmul.mubr.f32.gmra.mrb[0].mxu0 %v152
    %v229 = vpop.f32.mrb[0].mxu0
    %v230 = vadd.f32 0.0, %v229
    %v231 = vpop.f32.mrb[0].mxu0
    %232 = vmatprep.mubr.f32.mxu0 0.0
    %233 = vmatmul.mubr.f32.gmra.mrb[0].mxu0 %v155
    %v234 = vpop.f32.mrb[0].mxu0
    %v235 = vadd.f32 0.0, %v234
    %v236 = vpop.f32.mrb[0].mxu0
    %237 = vmatprep.mubr.f32.mxu0 0.0
    %238 = vmatmul.mubr.f32.gmra.mrb[0].mxu0 %v158
    %v239 = vpop.f32.mrb[0].mxu0
    %v240 = vadd.f32 0.0, %v239
    %v241 = vpop.f32.mrb[0].mxu0
    %242 = vdwg.mxu0
    %vm243 = vcmask 523264
    %244 = vst.msk [vmem:[#allocation2] sm:$0xff] %vm243, %v230
    %245 = vst.msk [vmem:[#allocation2 + $0x8] sm:$0xff] %vm243, %v235
    %vm246 = vcmask 517120
    %247 = vst.msk [vmem:[#allocation2 + $0x10] sm:$0x3] %vm246, %v240
    %v248 = vld [vmem:[%s5] sm:$0xff]
    %v249 = vld [vmem:[%s5 + $0x8] sm:$0xff]
    %v250 = vld [vmem:[%s6] sm:$0x1]
    %v252 = vlaneseq
    %v253 = vshrl.u32 %v252, 7
    %v254 = vsub.s32 0, %v253
    %v255 = vrot.slane %v250, %v254
    %v257 = vld [vmem:[#allocation2] sm:$0x3]
    %259 = vset.pattern.permute.xlu0 0
    %260 = vperm.xlu0 %259, %v144
    %v261 = vpop.permute.xlu0 %260
    %v263 = vmul.f32 %v261, %v257
    %v264 = vadd.f32 %v263, %v255
    %v265 = vld [vmem:[#allocation2 + $0x2] sm:$0x3]
    %266 = vset.pattern.permute.xlu0 1
    %267 = vperm.xlu0 %266, %v144
    %v268 = vpop.permute.xlu0 %267
    %v270 = vmul.f32 %v268, %v265
    %v271 = vadd.f32 %v270, %v255
    %v272 = vld [vmem:[#allocation2 + $0x4] sm:$0x3]
    %273 = vset.pattern.permute.xlu0 2
    %274 = vperm.xlu0 %273, %v144
    %v275 = vpop.permute.xlu0 %274
    %v277 = vmul.f32 %v275, %v272
    %v278 = vadd.f32 %v277, %v255
    %v279 = vld [vmem:[#allocation2 + $0x6] sm:$0x3]
    %280 = vset.pattern.permute.xlu0 3
    %281 = vperm.xlu0 %280, %v144
    %v282 = vpop.permute.xlu0 %281
    %v284 = vmul.f32 %v282, %v279
    %v285 = vadd.f32 %v284, %v255
    %v286 = vld [vmem:[#allocation2 + $0x8] sm:$0x3]
    %287 = vset.pattern.permute.xlu0 4
    %288 = vperm.xlu0 %287, %v144
    %v289 = vpop.permute.xlu0 %288
    %v291 = vmul.f32 %v289, %v286
    %v292 = vadd.f32 %v291, %v255
    %v293 = vld [vmem:[#allocation2 + $0xa] sm:$0x3]
    %294 = vset.pattern.permute.xlu0 5
    %295 = vperm.xlu0 %294, %v144
    %v296 = vpop.permute.xlu0 %295
    %v298 = vmul.f32 %v296, %v293
    %v299 = vadd.f32 %v298, %v255
    %v300 = vld [vmem:[#allocation2 + $0xc] sm:$0x3]
    %301 = vset.pattern.permute.xlu0 6
    %302 = vperm.xlu0 %301, %v144
    %v303 = vpop.permute.xlu0 %302
    %v305 = vmul.f32 %v303, %v300
    %v306 = vadd.f32 %v305, %v255
    %v307 = vld [vmem:[#allocation2 + $0xe] sm:$0x3]
    %308 = vset.pattern.permute.xlu0 7
    %309 = vperm.xlu0 %308, %v144
    %v310 = vpop.permute.xlu0 %309
    %v312 = vmul.f32 %v310, %v307
    %v313 = vadd.f32 %v312, %v255
    %v314 = vld [vmem:[#allocation2 + $0x10] sm:$0x3]
    %315 = vset.pattern.permute.xlu0 8
    %316 = vperm.xlu0 %315, %v144
    %v317 = vpop.permute.xlu0 %316
    %v319 = vmul.f32 %v317, %v314
    %v320 = vadd.f32 %v319, %v255
    %vm321 = vcmask 130048
    %v323 = vsel %vm321, 0.0, 0
    %325 = vmatprep.subr.mxu0 0.0
    %326 = vmatpush1.msra.mxu0 %v248
    %327 = vmatprep.subr.mxu0 0.0
    %328 = vmatpush1.msra.mxu0 %v249
    %329 = vmatprep.subr.mxu0 0.0
    %330 = vmatpush1.msra.mxu0 0.0
    %331 = vmatprep.subr.mxu0 0.0
    %332 = vmatpush1.msra.mxu0 0.0
    %333 = vmatprep.subr.mxu0 0.0
    %334 = vmatpush1.msra.mxu0 0.0
    %335 = vmatprep.subr.mxu0 0.0
    %336 = vmatpush1.msra.mxu0 0.0
    %337 = vmatprep.subr.mxu0 0.0
    %338 = vmatpush1.msra.mxu0 0.0
    %339 = vmatprep.subr.mxu0 0.0
    %340 = vmatpush1.msra.mxu0 0.0
    %341 = vmatprep.subr.mxu0 0.0
    %342 = vmatpush1.msra.mxu0 0.0
    %343 = vmatprep.subr.mxu0 0.0
    %344 = vmatpush1.msra.mxu0 0.0
    %345 = vmatprep.subr.mxu0 0.0
    %346 = vmatpush1.msra.mxu0 0.0
    %347 = vmatprep.subr.mxu0 0.0
    %348 = vmatpush1.msra.mxu0 0.0
    %349 = vmatprep.subr.mxu0 0.0
    %350 = vmatpush1.msra.mxu0 0.0
    %351 = vmatprep.subr.mxu0 0.0
    %352 = vmatpush1.msra.mxu0 0.0
    %353 = vmatprep.subr.mxu0 0.0
    %354 = vmatpush1.msra.mxu0 0.0
    %355 = vmatprep.subr.mxu0 0.0
    %356 = vmatpush1.msra.mxu0 0.0
    %357 = vmatprep.subr.mxu0 0.0
    %358 = vmatpush1.msra.mxu0 0.0
    %359 = vmatprep.subr.mxu0 0.0
    %360 = vmatpush1.msra.mxu0 0.0
    %361 = vmatprep.subr.mxu0 0.0
    %362 = vmatpush1.msra.mxu0 0.0
    %363 = vmatprep.subr.mxu0 0.0
    %364 = vmatpush1.msra.mxu0 0.0
    %365 = vmatprep.subr.mxu0 0.0
    %366 = vmatpush1.msra.mxu0 0.0
    %367 = vmatprep.subr.mxu0 0.0
    %368 = vmatpush1.msra.mxu0 0.0
    %369 = vmatprep.subr.mxu0 0.0
    %370 = vmatpush1.msra.mxu0 0.0
    %371 = vmatprep.subr.mxu0 0.0
    %372 = vmatpush1.msra.mxu0 0.0
    %373 = vmatprep.subr.mxu0 0.0
    %374 = vmatpush1.msra.mxu0 0.0
    %375 = vmatprep.subr.mxu0 0.0
    %376 = vmatpush1.msra.mxu0 0.0
    %377 = vmatprep.subr.mxu0 0.0
    %378 = vmatpush1.msra.mxu0 0.0
    %379 = vmatprep.subr.mxu0 0.0
    %380 = vmatpush1.msra.mxu0 0.0
    %381 = vmatprep.subr.mxu0 0.0
    %382 = vmatpush1.msra.mxu0 0.0
    %383 = vmatprep.subr.mxu0 0.0
    %384 = vmatpush1.msra.mxu0 0.0
    %385 = vmatprep.subr.mxu0 0.0
    %386 = vmatpush1.msra.mxu0 0.0
    %387 = vmatprep.subr.mxu0 0.0
    %388 = vmatpush1.msra.mxu0 0.0
    %389 = vmatprep.mubr.f32.mxu0 0.0
    %390 = vmatmul.mubr.f32.gmra.mrb[0].mxu0 %v323
    %v391 = vpop.f32.mrb[0].mxu0
    %v392 = vadd.f32 0.0, %v391
    %v393 = vpop.f32.mrb[0].mxu0
    %394 = vdwg.mxu0
    %v395 = vadd.f32 %v264, %v392
    %v396 = vxor.u32 %v395, 2147483648
    %v397 = vmul.f32 %v396, 1.442695
    %v398 = vpow.pop %v397
    %v399 = vadd.f32 %v398, 1.0
    %v400 = vrcp.pop %v399
    %v401 = vmul.f32 1.0, %v400
    %v402 = vtanh.pop %v395
    %v403 = vmul.f32 %v401, 0.0
    %405 = vrot.lane.b32.xlu0 %v402, 96
    %v406 = vpop.permute.xlu0 %405
    %v408 = vmul.f32 %v401, %v406
    %410 = vrot.lane.b32.xlu0 %v408, 16
    %v411 = vpop.permute.xlu0 %410
    %v413 = vadd.f32 %v403, %v411
    %v414 = vtanh.pop %v413
    %416 = vrot.lane.b32.xlu0 %v414, 32
    %v417 = vpop.permute.xlu0 %416
    %v419 = vmul.f32 %v401, %v417
    %v422 = vunpack.c.l.s4 1983009808
    %v423 = vunpack.c.0.s8 %v422
    %v424 = vlaneseq
    %v425 = vshrl.u32 %v424, 7
    %v426 = vsub.s32 %v423, %v425
    %v427 = vrot.slane %v419, %v426
    %428 = vrot.lane.b32.xlu0 %v427, 80
    %v429 = vpop.permute.xlu0 %428
    %vm431 = vcmask 123904
    %432 = vst.msk [vmem:[#allocation3] sm:$0x3] %vm431, %v429
    %433 = vrot.lane.b32.xlu0 %v419, 80
    %v434 = vpop.permute.xlu0 %433
    %v435 = vsel %vm321, %v434, 0
    %437 = vmatprep.subr.mxu0 0.0
    %438 = vmatpush1.msra.mxu0 %v248
    %439 = vmatprep.subr.mxu0 0.0
    %440 = vmatpush1.msra.mxu0 %v249
    %441 = vmatprep.subr.mxu0 0.0
    %442 = vmatpush1.msra.mxu0 0.0
    %443 = vmatprep.subr.mxu0 0.0
    %444 = vmatpush1.msra.mxu0 0.0
    %445 = vmatprep.subr.mxu0 0.0
    %446 = vmatpush1.msra.mxu0 0.0
    %447 = vmatprep.subr.mxu0 0.0
    %448 = vmatpush1.msra.mxu0 0.0
    %449 = vmatprep.subr.mxu0 0.0
    %450 = vmatpush1.msra.mxu0 0.0
    %451 = vmatprep.subr.mxu0 0.0
    %452 = vmatpush1.msra.mxu0 0.0
    %453 = vmatprep.subr.mxu0 0.0
    %454 = vmatpush1.msra.mxu0 0.0
    %455 = vmatprep.subr.mxu0 0.0
    %456 = vmatpush1.msra.mxu0 0.0
    %457 = vmatprep.subr.mxu0 0.0
    %458 = vmatpush1.msra.mxu0 0.0
    %459 = vmatprep.subr.mxu0 0.0
    %460 = vmatpush1.msra.mxu0 0.0
    %461 = vmatprep.subr.mxu0 0.0
    %462 = vmatpush1.msra.mxu0 0.0
    %463 = vmatprep.subr.mxu0 0.0
    %464 = vmatpush1.msra.mxu0 0.0
    %465 = vmatprep.subr.mxu0 0.0
    %466 = vmatpush1.msra.mxu0 0.0
    %467 = vmatprep.subr.mxu0 0.0
    %468 = vmatpush1.msra.mxu0 0.0
    %469 = vmatprep.subr.mxu0 0.0
    %470 = vmatpush1.msra.mxu0 0.0
    %471 = vmatprep.subr.mxu0 0.0
    %472 = vmatpush1.msra.mxu0 0.0
    %473 = vmatprep.subr.mxu0 0.0
    %474 = vmatpush1.msra.mxu0 0.0
    %475 = vmatprep.subr.mxu0 0.0
    %476 = vmatpush1.msra.mxu0 0.0
    %477 = vmatprep.subr.mxu0 0.0
    %478 = vmatpush1.msra.mxu0 0.0
    %479 = vmatprep.subr.mxu0 0.0
    %480 = vmatpush1.msra.mxu0 0.0
    %481 = vmatprep.subr.mxu0 0.0
    %482 = vmatpush1.msra.mxu0 0.0
    %483 = vmatprep.subr.mxu0 0.0
    %484 = vmatpush1.msra.mxu0 0.0
    %485 = vmatprep.subr.mxu0 0.0
    %486 = vmatpush1.msra.mxu0 0.0
    %487 = vmatprep.subr.mxu0 0.0
    %488 = vmatpush1.msra.mxu0 0.0
    %489 = vmatprep.subr.mxu0 0.0
    %490 = vmatpush1.msra.mxu0 0.0
    %491 = vmatprep.subr.mxu0 0.0
    %492 = vmatpush1.msra.mxu0 0.0
    %493 = vmatprep.subr.mxu0 0.0
    %494 = vmatpush1.msra.mxu0 0.0
    %495 = vmatprep.subr.mxu0 0.0
    %496 = vmatpush1.msra.mxu0 0.0
    %497 = vmatprep.subr.mxu0 0.0
    %498 = vmatpush1.msra.mxu0 0.0
    %499 = vmatprep.subr.mxu0 0.0
    %500 = vmatpush1.msra.mxu0 0.0
    %501 = vmatprep.mubr.f32.mxu0 0.0
    %502 = vmatmul.mubr.f32.gmra.mrb[0].mxu0 %v435
    %v503 = vpop.f32.mrb[0].mxu0
    %v504 = vadd.f32 0.0, %v503
    %v505 = vpop.f32.mrb[0].mxu0
    %506 = vdwg.mxu0
    %v507 = vadd.f32 %v271, %v504
    %v508 = vxor.u32 %v507, 2147483648
    %v509 = vmul.f32 %v508, 1.442695
    %v510 = vpow.pop %v509
    %v511 = vadd.f32 %v510, 1.0
    %v512 = vrcp.pop %v511
    %v513 = vmul.f32 1.0, %v512
    %v514 = vtanh.pop %v507
    %v515 = vmul.f32 %v513, %v413
    %517 = vrot.lane.b32.xlu0 %v514, 96
    %v518 = vpop.permute.xlu0 %517
    %v520 = vmul.f32 %v513, %v518
    %522 = vrot.lane.b32.xlu0 %v520, 16
    %v523 = vpop.permute.xlu0 %522
    %v525 = vadd.f32 %v515, %v523
    %v526 = vtanh.pop %v525
    %528 = vrot.lane.b32.xlu0 %v526, 32
    %v529 = vpop.permute.xlu0 %528
    %v531 = vmul.f32 %v513, %v529
    %v534 = vunpack.c.l.s4 1983009808
    %v535 = vunpack.c.0.s8 %v534
    %v536 = vlaneseq
    %v537 = vshrl.u32 %v536, 7
    %v538 = vsub.s32 %v535, %v537
    %v539 = vrot.slane %v531, %v538
    %540 = vrot.lane.b32.xlu0 %v539, 96
    %v541 = vpop.permute.xlu0 %540
    %vm543 = vcmask 255104
    %544 = vst.msk [vmem:[#allocation3] sm:$0x3] %vm543, %v541
    %545 = vrot.lane.b32.xlu0 %v531, 80
    %v546 = vpop.permute.xlu0 %545
    %v547 = vsel %vm321, %v546, 0
    %549 = vmatprep.subr.mxu0 0.0
    %550 = vmatpush1.msra.mxu0 %v248
    %551 = vmatprep.subr.mxu0 0.0
    %552 = vmatpush1.msra.mxu0 %v249
    %553 = vmatprep.subr.mxu0 0.0
    %554 = vmatpush1.msra.mxu0 0.0
    %555 = vmatprep.subr.mxu0 0.0
    %556 = vmatpush1.msra.mxu0 0.0
    %557 = vmatprep.subr.mxu0 0.0
    %558 = vmatpush1.msra.mxu0 0.0
    %559 = vmatprep.subr.mxu0 0.0
    %560 = vmatpush1.msra.mxu0 0.0
    %561 = vmatprep.subr.mxu0 0.0
    %562 = vmatpush1.msra.mxu0 0.0
    %563 = vmatprep.subr.mxu0 0.0
    %564 = vmatpush1.msra.mxu0 0.0
    %565 = vmatprep.subr.mxu0 0.0
    %566 = vmatpush1.msra.mxu0 0.0
    %567 = vmatprep.subr.mxu0 0.0
    %568 = vmatpush1.msra.mxu0 0.0
    %569 = vmatprep.subr.mxu0 0.0
    %570 = vmatpush1.msra.mxu0 0.0
    %571 = vmatprep.subr.mxu0 0.0
    %572 = vmatpush1.msra.mxu0 0.0
    %573 = vmatprep.subr.mxu0 0.0
    %574 = vmatpush1.msra.mxu0 0.0
    %575 = vmatprep.subr.mxu0 0.0
    %576 = vmatpush1.msra.mxu0 0.0
    %577 = vmatprep.subr.mxu0 0.0
    %578 = vmatpush1.msra.mxu0 0.0
    %579 = vmatprep.subr.mxu0 0.0
    %580 = vmatpush1.msra.mxu0 0.0
    %581 = vmatprep.subr.mxu0 0.0
    %582 = vmatpush1.msra.mxu0 0.0
    %583 = vmatprep.subr.mxu0 0.0
    %584 = vmatpush1.msra.mxu0 0.0
    %585 = vmatprep.subr.mxu0 0.0
    %586 = vmatpush1.msra.mxu0 0.0
    %587 = vmatprep.subr.mxu0 0.0
    %588 = vmatpush1.msra.mxu0 0.0
    %589 = vmatprep.subr.mxu0 0.0
    %590 = vmatpush1.msra.mxu0 0.0
    %591 = vmatprep.subr.mxu0 0.0
    %592 = vmatpush1.msra.mxu0 0.0
    %593 = vmatprep.subr.mxu0 0.0
    %594 = vmatpush1.msra.mxu0 0.0
    %595 = vmatprep.subr.mxu0 0.0
    %596 = vmatpush1.msra.mxu0 0.0
    %597 = vmatprep.subr.mxu0 0.0
    %598 = vmatpush1.msra.mxu0 0.0
    %599 = vmatprep.subr.mxu0 0.0
    %600 = vmatpush1.msra.mxu0 0.0
    %601 = vmatprep.subr.mxu0 0.0
    %602 = vmatpush1.msra.mxu0 0.0
    %603 = vmatprep.subr.mxu0 0.0
    %604 = vmatpush1.msra.mxu0 0.0
    %605 = vmatprep.subr.mxu0 0.0
    %606 = vmatpush1.msra.mxu0 0.0
    %607 = vmatprep.subr.mxu0 0.0
    %608 = vmatpush1.msra.mxu0 0.0
    %609 = vmatprep.subr.mxu0 0.0
    %610 = vmatpush1.msra.mxu0 0.0
    %611 = vmatprep.subr.mxu0 0.0
    %612 = vmatpush1.msra.mxu0 0.0
    %613 = vmatprep.mubr.f32.mxu0 0.0
    %614 = vmatmul.mubr.f32.gmra.mrb[0].mxu0 %v547
    %v615 = vpop.f32.mrb[0].mxu0
    %v616 = vadd.f32 0.0, %v615
    %v617 = vpop.f32.mrb[0].mxu0
    %618 = vdwg.mxu0
    %v619 = vadd.f32 %v278, %v616
    %v620 = vxor.u32 %v619, 2147483648
    %v621 = vmul.f32 %v620, 1.442695
    %v622 = vpow.pop %v621
    %v623 = vadd.f32 %v622, 1.0
    %v624 = vrcp.pop %v623
    %v625 = vmul.f32 1.0, %v624
    %v626 = vtanh.pop %v619
    %v627 = vmul.f32 %v625, %v525
    %629 = vrot.lane.b32.xlu0 %v626, 96
    %v630 = vpop.permute.xlu0 %629
    %v632 = vmul.f32 %v625, %v630
    %634 = vrot.lane.b32.xlu0 %v632, 16
    %v635 = vpop.permute.xlu0 %634
    %v637 = vadd.f32 %v627, %v635
    %v638 = vtanh.pop %v637
    %640 = vrot.lane.b32.xlu0 %v638, 32
    %v641 = vpop.permute.xlu0 %640
    %v643 = vmul.f32 %v625, %v641
    %v646 = vunpack.c.l.s4 1983009808
    %v647 = vunpack.c.0.s8 %v646
    %v648 = vlaneseq
    %v649 = vshrl.u32 %v648, 7
    %v650 = vsub.s32 %v647, %v649
    %v651 = vrot.slane %v643, %v650
    %652 = vrot.lane.b32.xlu0 %v651, 112
    %v653 = vpop.permute.xlu0 %652
    %vm655 = vcmask 386304
    %656 = vst.msk [vmem:[#allocation3] sm:$0x3] %vm655, %v653
    %657 = vrot.lane.b32.xlu0 %v643, 80
    %v658 = vpop.permute.xlu0 %657
    %v659 = vsel %vm321, %v658, 0
    %661 = vmatprep.subr.mxu0 0.0
    %662 = vmatpush1.msra.mxu0 %v248
    %663 = vmatprep.subr.mxu0 0.0
    %664 = vmatpush1.msra.mxu0 %v249
    %665 = vmatprep.subr.mxu0 0.0
    %666 = vmatpush1.msra.mxu0 0.0
    %667 = vmatprep.subr.mxu0 0.0
    %668 = vmatpush1.msra.mxu0 0.0
    %669 = vmatprep.subr.mxu0 0.0
    %670 = vmatpush1.msra.mxu0 0.0
    %671 = vmatprep.subr.mxu0 0.0
    %672 = vmatpush1.msra.mxu0 0.0
    %673 = vmatprep.subr.mxu0 0.0
    %674 = vmatpush1.msra.mxu0 0.0
    %675 = vmatprep.subr.mxu0 0.0
    %676 = vmatpush1.msra.mxu0 0.0
    %677 = vmatprep.subr.mxu0 0.0
    %678 = vmatpush1.msra.mxu0 0.0
    %679 = vmatprep.subr.mxu0 0.0
    %680 = vmatpush1.msra.mxu0 0.0
    %681 = vmatprep.subr.mxu0 0.0
    %682 = vmatpush1.msra.mxu0 0.0
    %683 = vmatprep.subr.mxu0 0.0
    %684 = vmatpush1.msra.mxu0 0.0
    %685 = vmatprep.subr.mxu0 0.0
    %686 = vmatpush1.msra.mxu0 0.0
    %687 = vmatprep.subr.mxu0 0.0
    %688 = vmatpush1.msra.mxu0 0.0
    %689 = vmatprep.subr.mxu0 0.0
    %690 = vmatpush1.msra.mxu0 0.0
    %691 = vmatprep.subr.mxu0 0.0
    %692 = vmatpush1.msra.mxu0 0.0
    %693 = vmatprep.subr.mxu0 0.0
    %694 = vmatpush1.msra.mxu0 0.0
    %695 = vmatprep.subr.mxu0 0.0
    %696 = vmatpush1.msra.mxu0 0.0
    %697 = vmatprep.subr.mxu0 0.0
    %698 = vmatpush1.msra.mxu0 0.0
    %699 = vmatprep.subr.mxu0 0.0
    %700 = vmatpush1.msra.mxu0 0.0
    %701 = vmatprep.subr.mxu0 0.0
    %702 = vmatpush1.msra.mxu0 0.0
    %703 = vmatprep.subr.mxu0 0.0
    %704 = vmatpush1.msra.mxu0 0.0
    %705 = vmatprep.subr.mxu0 0.0
    %706 = vmatpush1.msra.mxu0 0.0
    %707 = vmatprep.subr.mxu0 0.0
    %708 = vmatpush1.msra.mxu0 0.0
    %709 = vmatprep.subr.mxu0 0.0
    %710 = vmatpush1.msra.mxu0 0.0
    %711 = vmatprep.subr.mxu0 0.0
    %712 = vmatpush1.msra.mxu0 0.0
    %713 = vmatprep.subr.mxu0 0.0
    %714 = vmatpush1.msra.mxu0 0.0
    %715 = vmatprep.subr.mxu0 0.0
    %716 = vmatpush1.msra.mxu0 0.0
    %717 = vmatprep.subr.mxu0 0.0
    %718 = vmatpush1.msra.mxu0 0.0
    %719 = vmatprep.subr.mxu0 0.0
    %720 = vmatpush1.msra.mxu0 0.0
    %721 = vmatprep.subr.mxu0 0.0
    %722 = vmatpush1.msra.mxu0 0.0
    %723 = vmatprep.subr.mxu0 0.0
    %724 = vmatpush1.msra.mxu0 0.0
    %725 = vmatprep.mubr.f32.mxu0 0.0
    %726 = vmatmul.mubr.f32.gmra.mrb[0].mxu0 %v659
    %v727 = vpop.f32.mrb[0].mxu0
    %v728 = vadd.f32 0.0, %v727
    %v729 = vpop.f32.mrb[0].mxu0
    %730 = vdwg.mxu0
    %v731 = vadd.f32 %v285, %v728
    %v732 = vxor.u32 %v731, 2147483648
    %v733 = vmul.f32 %v732, 1.442695
    %v734 = vpow.pop %v733
    %v735 = vadd.f32 %v734, 1.0
    %v736 = vrcp.pop %v735
    %v737 = vmul.f32 1.0, %v736
    %v738 = vtanh.pop %v731
    %v739 = vmul.f32 %v737, %v637
    %741 = vrot.lane.b32.xlu0 %v738, 96
    %v742 = vpop.permute.xlu0 %741
    %v744 = vmul.f32 %v737, %v742
    %746 = vrot.lane.b32.xlu0 %v744, 16
    %v747 = vpop.permute.xlu0 %746
    %v749 = vadd.f32 %v739, %v747
    %v750 = vtanh.pop %v749
    %752 = vrot.lane.b32.xlu0 %v750, 32
    %v753 = vpop.permute.xlu0 %752
    %v755 = vmul.f32 %v737, %v753
    %vm756 = vcmask 517504
    %757 = vst.msk [vmem:[#allocation3] sm:$0x3] %vm756, %v755
    %759 = vrot.lane.b32.xlu0 %v755, 80
    %v760 = vpop.permute.xlu0 %759
    %v761 = vsel %vm321, %v760, 0
    %763 = vmatprep.subr.mxu0 0.0
    %764 = vmatpush1.msra.mxu0 %v248
    %765 = vmatprep.subr.mxu0 0.0
    %766 = vmatpush1.msra.mxu0 %v249
    %767 = vmatprep.subr.mxu0 0.0
    %768 = vmatpush1.msra.mxu0 0.0
    %769 = vmatprep.subr.mxu0 0.0
    %770 = vmatpush1.msra.mxu0 0.0
    %771 = vmatprep.subr.mxu0 0.0
    %772 = vmatpush1.msra.mxu0 0.0
    %773 = vmatprep.subr.mxu0 0.0
    %774 = vmatpush1.msra.mxu0 0.0
    %775 = vmatprep.subr.mxu0 0.0
    %776 = vmatpush1.msra.mxu0 0.0
    %777 = vmatprep.subr.mxu0 0.0
    %778 = vmatpush1.msra.mxu0 0.0
    %779 = vmatprep.subr.mxu0 0.0
    %780 = vmatpush1.msra.mxu0 0.0
    %781 = vmatprep.subr.mxu0 0.0
    %782 = vmatpush1.msra.mxu0 0.0
    %783 = vmatprep.subr.mxu0 0.0
    %784 = vmatpush1.msra.mxu0 0.0
    %785 = vmatprep.subr.mxu0 0.0
    %786 = vmatpush1.msra.mxu0 0.0
    %787 = vmatprep.subr.mxu0 0.0
    %788 = vmatpush1.msra.mxu0 0.0
    %789 = vmatprep.subr.mxu0 0.0
    %790 = vmatpush1.msra.mxu0 0.0
    %791 = vmatprep.subr.mxu0 0.0
    %792 = vmatpush1.msra.mxu0 0.0
    %793 = vmatprep.subr.mxu0 0.0
    %794 = vmatpush1.msra.mxu0 0.0
    %795 = vmatprep.subr.mxu0 0.0
    %796 = vmatpush1.msra.mxu0 0.0
    %797 = vmatprep.subr.mxu0 0.0
    %798 = vmatpush1.msra.mxu0 0.0
    %799 = vmatprep.subr.mxu0 0.0
    %800 = vmatpush1.msra.mxu0 0.0
    %801 = vmatprep.subr.mxu0 0.0
    %802 = vmatpush1.msra.mxu0 0.0
    %803 = vmatprep.subr.mxu0 0.0
    %804 = vmatpush1.msra.mxu0 0.0
    %805 = vmatprep.subr.mxu0 0.0
    %806 = vmatpush1.msra.mxu0 0.0
    %807 = vmatprep.subr.mxu0 0.0
    %808 = vmatpush1.msra.mxu0 0.0
    %809 = vmatprep.subr.mxu0 0.0
    %810 = vmatpush1.msra.mxu0 0.0
    %811 = vmatprep.subr.mxu0 0.0
    %812 = vmatpush1.msra.mxu0 0.0
    %813 = vmatprep.subr.mxu0 0.0
    %814 = vmatpush1.msra.mxu0 0.0
    %815 = vmatprep.subr.mxu0 0.0
    %816 = vmatpush1.msra.mxu0 0.0
    %817 = vmatprep.subr.mxu0 0.0
    %818 = vmatpush1.msra.mxu0 0.0
    %819 = vmatprep.subr.mxu0 0.0
    %820 = vmatpush1.msra.mxu0 0.0
    %821 = vmatprep.subr.mxu0 0.0
    %822 = vmatpush1.msra.mxu0 0.0
    %823 = vmatprep.subr.mxu0 0.0
    %824 = vmatpush1.msra.mxu0 0.0
    %825 = vmatprep.subr.mxu0 0.0
    %826 = vmatpush1.msra.mxu0 0.0
    %827 = vmatprep.mubr.f32.mxu0 0.0
    %828 = vmatmul.mubr.f32.gmra.mrb[0].mxu0 %v761
    %v829 = vpop.f32.mrb[0].mxu0
    %v830 = vadd.f32 0.0, %v829
    %v831 = vpop.f32.mrb[0].mxu0
    %832 = vdwg.mxu0
    %v833 = vadd.f32 %v292, %v830
    %v834 = vxor.u32 %v833, 2147483648
    %v835 = vmul.f32 %v834, 1.442695
    %v836 = vpow.pop %v835
    %v837 = vadd.f32 %v836, 1.0
    %v838 = vrcp.pop %v837
    %v839 = vmul.f32 1.0, %v838
    %v840 = vtanh.pop %v833
    %v841 = vmul.f32 %v839, %v749
    %843 = vrot.lane.b32.xlu0 %v840, 96
    %v844 = vpop.permute.xlu0 %843
    %v846 = vmul.f32 %v839, %v844
    %848 = vrot.lane.b32.xlu0 %v846, 16
    %v849 = vpop.permute.xlu0 %848
    %v851 = vadd.f32 %v841, %v849
    %v852 = vtanh.pop %v851
    %854 = vrot.lane.b32.xlu0 %v852, 32
    %v855 = vpop.permute.xlu0 %854
    %v857 = vmul.f32 %v839, %v855
    %v860 = vunpack.c.l.s4 1983009808
    %v861 = vunpack.c.0.s8 %v860
    %v862 = vlaneseq
    %v863 = vshrl.u32 %v862, 7
    %v864 = vsub.s32 %v861, %v863
    %v865 = vrot.slane %v857, %v864
    %866 = vrot.lane.b32.xlu0 %v865, 16
    %v867 = vpop.permute.xlu0 %866
    %vm869 = vcmask 648704
    %870 = vst.msk [vmem:[#allocation3] sm:$0x3] %vm869, %v867
    %871 = vrot.lane.b32.xlu0 %v857, 80
    %v872 = vpop.permute.xlu0 %871
    %v873 = vsel %vm321, %v872, 0
    %875 = vmatprep.subr.mxu0 0.0
    %876 = vmatpush1.msra.mxu0 %v248
    %877 = vmatprep.subr.mxu0 0.0
    %878 = vmatpush1.msra.mxu0 %v249
    %879 = vmatprep.subr.mxu0 0.0
    %880 = vmatpush1.msra.mxu0 0.0
    %881 = vmatprep.subr.mxu0 0.0
    %882 = vmatpush1.msra.mxu0 0.0
    %883 = vmatprep.subr.mxu0 0.0
    %884 = vmatpush1.msra.mxu0 0.0
    %885 = vmatprep.subr.mxu0 0.0
    %886 = vmatpush1.msra.mxu0 0.0
    %887 = vmatprep.subr.mxu0 0.0
    %888 = vmatpush1.msra.mxu0 0.0
    %889 = vmatprep.subr.mxu0 0.0
    %890 = vmatpush1.msra.mxu0 0.0
    %891 = vmatprep.subr.mxu0 0.0
    %892 = vmatpush1.msra.mxu0 0.0
    %893 = vmatprep.subr.mxu0 0.0
    %894 = vmatpush1.msra.mxu0 0.0
    %895 = vmatprep.subr.mxu0 0.0
    %896 = vmatpush1.msra.mxu0 0.0
    %897 = vmatprep.subr.mxu0 0.0
    %898 = vmatpush1.msra.mxu0 0.0
    %899 = vmatprep.subr.mxu0 0.0
    %900 = vmatpush1.msra.mxu0 0.0
    %901 = vmatprep.subr.mxu0 0.0
    %902 = vmatpush1.msra.mxu0 0.0
    %903 = vmatprep.subr.mxu0 0.0
    %904 = vmatpush1.msra.mxu0 0.0
    %905 = vmatprep.subr.mxu0 0.0
    %906 = vmatpush1.msra.mxu0 0.0
    %907 = vmatprep.subr.mxu0 0.0
    %908 = vmatpush1.msra.mxu0 0.0
    %909 = vmatprep.subr.mxu0 0.0
    %910 = vmatpush1.msra.mxu0 0.0
    %911 = vmatprep.subr.mxu0 0.0
    %912 = vmatpush1.msra.mxu0 0.0
    %913 = vmatprep.subr.mxu0 0.0
    %914 = vmatpush1.msra.mxu0 0.0
    %915 = vmatprep.subr.mxu0 0.0
    %916 = vmatpush1.msra.mxu0 0.0
    %917 = vmatprep.subr.mxu0 0.0
    %918 = vmatpush1.msra.mxu0 0.0
    %919 = vmatprep.subr.mxu0 0.0
    %920 = vmatpush1.msra.mxu0 0.0
    %921 = vmatprep.subr.mxu0 0.0
    %922 = vmatpush1.msra.mxu0 0.0
    %923 = vmatprep.subr.mxu0 0.0
    %924 = vmatpush1.msra.mxu0 0.0
    %925 = vmatprep.subr.mxu0 0.0
    %926 = vmatpush1.msra.mxu0 0.0
    %927 = vmatprep.subr.mxu0 0.0
    %928 = vmatpush1.msra.mxu0 0.0
    %929 = vmatprep.subr.mxu0 0.0
    %930 = vmatpush1.msra.mxu0 0.0
    %931 = vmatprep.subr.mxu0 0.0
    %932 = vmatpush1.msra.mxu0 0.0
    %933 = vmatprep.subr.mxu0 0.0
    %934 = vmatpush1.msra.mxu0 0.0
    %935 = vmatprep.subr.mxu0 0.0
    %936 = vmatpush1.msra.mxu0 0.0
    %937 = vmatprep.subr.mxu0 0.0
    %938 = vmatpush1.msra.mxu0 0.0
    %939 = vmatprep.mubr.f32.mxu0 0.0
    %940 = vmatmul.mubr.f32.gmra.mrb[0].mxu0 %v873
    %v941 = vpop.f32.mrb[0].mxu0
    %v942 = vadd.f32 0.0, %v941
    %v943 = vpop.f32.mrb[0].mxu0
    %944 = vdwg.mxu0
    %v945 = vadd.f32 %v299, %v942
    %v946 = vxor.u32 %v945, 2147483648
    %v947 = vmul.f32 %v946, 1.442695
    %v948 = vpow.pop %v947
    %v949 = vadd.f32 %v948, 1.0
    %v950 = vrcp.pop %v949
    %v951 = vmul.f32 1.0, %v950
    %v952 = vtanh.pop %v945
    %v953 = vmul.f32 %v951, %v851
    %955 = vrot.lane.b32.xlu0 %v952, 96
    %v956 = vpop.permute.xlu0 %955
    %v958 = vmul.f32 %v951, %v956
    %960 = vrot.lane.b32.xlu0 %v958, 16
    %v961 = vpop.permute.xlu0 %960
    %v963 = vadd.f32 %v953, %v961
    %v964 = vtanh.pop %v963
    %966 = vrot.lane.b32.xlu0 %v964, 32
    %v967 = vpop.permute.xlu0 %966
    %v969 = vmul.f32 %v951, %v967
    %v972 = vunpack.c.l.s4 1983009808
    %v973 = vunpack.c.0.s8 %v972
    %v974 = vlaneseq
    %v975 = vshrl.u32 %v974, 7
    %v976 = vsub.s32 %v973, %v975
    %v977 = vrot.slane %v969, %v976
    %978 = vrot.lane.b32.xlu0 %v977, 32
    %v979 = vpop.permute.xlu0 %978
    %vm981 = vcmask 779904
    %982 = vst.msk [vmem:[#allocation3] sm:$0x3] %vm981, %v979
    %983 = vrot.lane.b32.xlu0 %v969, 80
    %v984 = vpop.permute.xlu0 %983
    %v985 = vsel %vm321, %v984, 0
    %987 = vmatprep.subr.mxu0 0.0
    %988 = vmatpush1.msra.mxu0 %v248
    %989 = vmatprep.subr.mxu0 0.0
    %990 = vmatpush1.msra.mxu0 %v249
    %991 = vmatprep.subr.mxu0 0.0
    %992 = vmatpush1.msra.mxu0 0.0
    %993 = vmatprep.subr.mxu0 0.0
    %994 = vmatpush1.msra.mxu0 0.0
    %995 = vmatprep.subr.mxu0 0.0
    %996 = vmatpush1.msra.mxu0 0.0
    %997 = vmatprep.subr.mxu0 0.0
    %998 = vmatpush1.msra.mxu0 0.0
    %999 = vmatprep.subr.mxu0 0.0
    %1000 = vmatpush1.msra.mxu0 0.0
    %1001 = vmatprep.subr.mxu0 0.0
    %1002 = vmatpush1.msra.mxu0 0.0
    %1003 = vmatprep.subr.mxu0 0.0
    %1004 = vmatpush1.msra.mxu0 0.0
    %1005 = vmatprep.subr.mxu0 0.0
    %1006 = vmatpush1.msra.mxu0 0.0
    %1007 = vmatprep.subr.mxu0 0.0
    %1008 = vmatpush1.msra.mxu0 0.0
    %1009 = vmatprep.subr.mxu0 0.0
    %1010 = vmatpush1.msra.mxu0 0.0
    %1011 = vmatprep.subr.mxu0 0.0
    %1012 = vmatpush1.msra.mxu0 0.0
    %1013 = vmatprep.subr.mxu0 0.0
    %1014 = vmatpush1.msra.mxu0 0.0
    %1015 = vmatprep.subr.mxu0 0.0
    %1016 = vmatpush1.msra.mxu0 0.0
    %1017 = vmatprep.subr.mxu0 0.0
    %1018 = vmatpush1.msra.mxu0 0.0
    %1019 = vmatprep.subr.mxu0 0.0
    %1020 = vmatpush1.msra.mxu0 0.0
    %1021 = vmatprep.subr.mxu0 0.0
    %1022 = vmatpush1.msra.mxu0 0.0
    %1023 = vmatprep.subr.mxu0 0.0
    %1024 = vmatpush1.msra.mxu0 0.0
    %1025 = vmatprep.subr.mxu0 0.0
    %1026 = vmatpush1.msra.mxu0 0.0
    %1027 = vmatprep.subr.mxu0 0.0
    %1028 = vmatpush1.msra.mxu0 0.0
    %1029 = vmatprep.subr.mxu0 0.0
    %1030 = vmatpush1.msra.mxu0 0.0
    %1031 = vmatprep.subr.mxu0 0.0
    %1032 = vmatpush1.msra.mxu0 0.0
    %1033 = vmatprep.subr.mxu0 0.0
    %1034 = vmatpush1.msra.mxu0 0.0
    %1035 = vmatprep.subr.mxu0 0.0
    %1036 = vmatpush1.msra.mxu0 0.0
    %1037 = vmatprep.subr.mxu0 0.0
    %1038 = vmatpush1.msra.mxu0 0.0
    %1039 = vmatprep.subr.mxu0 0.0
    %1040 = vmatpush1.msra.mxu0 0.0
    %1041 = vmatprep.subr.mxu0 0.0
    %1042 = vmatpush1.msra.mxu0 0.0
    %1043 = vmatprep.subr.mxu0 0.0
    %1044 = vmatpush1.msra.mxu0 0.0
    %1045 = vmatprep.subr.mxu0 0.0
    %1046 = vmatpush1.msra.mxu0 0.0
    %1047 = vmatprep.subr.mxu0 0.0
    %1048 = vmatpush1.msra.mxu0 0.0
    %1049 = vmatprep.subr.mxu0 0.0
    %1050 = vmatpush1.msra.mxu0 0.0
    %1051 = vmatprep.mubr.f32.mxu0 0.0
    %1052 = vmatmul.mubr.f32.gmra.mrb[0].mxu0 %v985
    %v1053 = vpop.f32.mrb[0].mxu0
    %v1054 = vadd.f32 0.0, %v1053
    %v1055 = vpop.f32.mrb[0].mxu0
    %1056 = vdwg.mxu0
    %v1057 = vadd.f32 %v306, %v1054
    %v1058 = vxor.u32 %v1057, 2147483648
    %v1059 = vmul.f32 %v1058, 1.442695
    %v1060 = vpow.pop %v1059
    %v1061 = vadd.f32 %v1060, 1.0
    %v1062 = vrcp.pop %v1061
    %v1063 = vmul.f32 1.0, %v1062
    %v1064 = vtanh.pop %v1057
    %v1065 = vmul.f32 %v1063, %v963
    %1067 = vrot.lane.b32.xlu0 %v1064, 96
    %v1068 = vpop.permute.xlu0 %1067
    %v1070 = vmul.f32 %v1063, %v1068
    %1072 = vrot.lane.b32.xlu0 %v1070, 16
    %v1073 = vpop.permute.xlu0 %1072
    %v1075 = vadd.f32 %v1065, %v1073
    %v1076 = vtanh.pop %v1075
    %1078 = vrot.lane.b32.xlu0 %v1076, 32
    %v1079 = vpop.permute.xlu0 %1078
    %v1081 = vmul.f32 %v1063, %v1079
    %v1084 = vunpack.c.l.s4 1983009808
    %v1085 = vunpack.c.0.s8 %v1084
    %v1086 = vlaneseq
    %v1087 = vshrl.u32 %v1086, 7
    %v1088 = vsub.s32 %v1085, %v1087
    %v1089 = vrot.slane %v1081, %v1088
    %1090 = vrot.lane.b32.xlu0 %v1089, 48
    %v1091 = vpop.permute.xlu0 %1090
    %vm1093 = vcmask 911104
    %1094 = vst.msk [vmem:[#allocation3] sm:$0x3] %vm1093, %v1091
    %1095 = vrot.lane.b32.xlu0 %v1081, 80
    %v1096 = vpop.permute.xlu0 %1095
    %v1097 = vsel %vm321, %v1096, 0
    %1099 = vmatprep.subr.mxu0 0.0
    %1100 = vmatpush1.msra.mxu0 %v248
    %1101 = vmatprep.subr.mxu0 0.0
    %1102 = vmatpush1.msra.mxu0 %v249
    %1103 = vmatprep.subr.mxu0 0.0
    %1104 = vmatpush1.msra.mxu0 0.0
    %1105 = vmatprep.subr.mxu0 0.0
    %1106 = vmatpush1.msra.mxu0 0.0
    %1107 = vmatprep.subr.mxu0 0.0
    %1108 = vmatpush1.msra.mxu0 0.0
    %1109 = vmatprep.subr.mxu0 0.0
    %1110 = vmatpush1.msra.mxu0 0.0
    %1111 = vmatprep.subr.mxu0 0.0
    %1112 = vmatpush1.msra.mxu0 0.0
    %1113 = vmatprep.subr.mxu0 0.0
    %1114 = vmatpush1.msra.mxu0 0.0
    %1115 = vmatprep.subr.mxu0 0.0
    %1116 = vmatpush1.msra.mxu0 0.0
    %1117 = vmatprep.subr.mxu0 0.0
    %1118 = vmatpush1.msra.mxu0 0.0
    %1119 = vmatprep.subr.mxu0 0.0
    %1120 = vmatpush1.msra.mxu0 0.0
    %1121 = vmatprep.subr.mxu0 0.0
    %1122 = vmatpush1.msra.mxu0 0.0
    %1123 = vmatprep.subr.mxu0 0.0
    %1124 = vmatpush1.msra.mxu0 0.0
    %1125 = vmatprep.subr.mxu0 0.0
    %1126 = vmatpush1.msra.mxu0 0.0
    %1127 = vmatprep.subr.mxu0 0.0
    %1128 = vmatpush1.msra.mxu0 0.0
    %1129 = vmatprep.subr.mxu0 0.0
    %1130 = vmatpush1.msra.mxu0 0.0
    %1131 = vmatprep.subr.mxu0 0.0
    %1132 = vmatpush1.msra.mxu0 0.0
    %1133 = vmatprep.subr.mxu0 0.0
    %1134 = vmatpush1.msra.mxu0 0.0
    %1135 = vmatprep.subr.mxu0 0.0
    %1136 = vmatpush1.msra.mxu0 0.0
    %1137 = vmatprep.subr.mxu0 0.0
    %1138 = vmatpush1.msra.mxu0 0.0
    %1139 = vmatprep.subr.mxu0 0.0
    %1140 = vmatpush1.msra.mxu0 0.0
    %1141 = vmatprep.subr.mxu0 0.0
    %1142 = vmatpush1.msra.mxu0 0.0
    %1143 = vmatprep.subr.mxu0 0.0
    %1144 = vmatpush1.msra.mxu0 0.0
    %1145 = vmatprep.subr.mxu0 0.0
    %1146 = vmatpush1.msra.mxu0 0.0
    %1147 = vmatprep.subr.mxu0 0.0
    %1148 = vmatpush1.msra.mxu0 0.0
    %1149 = vmatprep.subr.mxu0 0.0
    %1150 = vmatpush1.msra.mxu0 0.0
    %1151 = vmatprep.subr.mxu0 0.0
    %1152 = vmatpush1.msra.mxu0 0.0
    %1153 = vmatprep.subr.mxu0 0.0
    %1154 = vmatpush1.msra.mxu0 0.0
    %1155 = vmatprep.subr.mxu0 0.0
    %1156 = vmatpush1.msra.mxu0 0.0
    %1157 = vmatprep.subr.mxu0 0.0
    %1158 = vmatpush1.msra.mxu0 0.0
    %1159 = vmatprep.subr.mxu0 0.0
    %1160 = vmatpush1.msra.mxu0 0.0
    %1161 = vmatprep.subr.mxu0 0.0
    %1162 = vmatpush1.msra.mxu0 0.0
    %1163 = vmatprep.mubr.f32.mxu0 0.0
    %1164 = vmatmul.mubr.f32.gmra.mrb[0].mxu0 %v1097
    %v1165 = vpop.f32.mrb[0].mxu0
    %v1166 = vadd.f32 0.0, %v1165
    %v1167 = vpop.f32.mrb[0].mxu0
    %1168 = vdwg.mxu0
    %v1169 = vadd.f32 %v313, %v1166
    %v1170 = vxor.u32 %v1169, 2147483648
    %v1171 = vmul.f32 %v1170, 1.442695
    %v1172 = vpow.pop %v1171
    %v1173 = vadd.f32 %v1172, 1.0
    %v1174 = vrcp.pop %v1173
    %v1175 = vmul.f32 1.0, %v1174
    %v1176 = vtanh.pop %v1169
    %v1177 = vmul.f32 %v1175, %v1075
    %1179 = vrot.lane.b32.xlu0 %v1176, 96
    %v1180 = vpop.permute.xlu0 %1179
    %v1182 = vmul.f32 %v1175, %v1180
    %1184 = vrot.lane.b32.xlu0 %v1182, 16
    %v1185 = vpop.permute.xlu0 %1184
    %v1187 = vadd.f32 %v1177, %v1185
    %v1188 = vtanh.pop %v1187
    %1190 = vrot.lane.b32.xlu0 %v1188, 32
    %v1191 = vpop.permute.xlu0 %1190
    %v1193 = vmul.f32 %v1175, %v1191
    %v1196 = vunpack.c.l.s4 1983009808
    %v1197 = vunpack.c.0.s8 %v1196
    %v1198 = vlaneseq
    %v1199 = vshrl.u32 %v1198, 7
    %v1200 = vsub.s32 %v1197, %v1199
    %v1201 = vrot.slane %v1193, %v1200
    %1202 = vrot.lane.b32.xlu0 %v1201, 64
    %v1203 = vpop.permute.xlu0 %1202
    %vm1205 = vcmask 1042304
    %1206 = vst.msk [vmem:[#allocation3] sm:$0x3] %vm1205, %v1203
    %1207 = vrot.lane.b32.xlu0 %v1193, 80
    %v1208 = vpop.permute.xlu0 %1207
    %v1209 = vsel %vm321, %v1208, 0
    %1211 = vmatprep.subr.mxu0 0.0
    %1212 = vmatpush1.msra.mxu0 %v248
    %1213 = vmatprep.subr.mxu0 0.0
    %1214 = vmatpush1.msra.mxu0 %v249
    %1215 = vmatprep.subr.mxu0 0.0
    %1216 = vmatpush1.msra.mxu0 0.0
    %1217 = vmatprep.subr.mxu0 0.0
    %1218 = vmatpush1.msra.mxu0 0.0
    %1219 = vmatprep.subr.mxu0 0.0
    %1220 = vmatpush1.msra.mxu0 0.0
    %1221 = vmatprep.subr.mxu0 0.0
    %1222 = vmatpush1.msra.mxu0 0.0
    %1223 = vmatprep.subr.mxu0 0.0
    %1224 = vmatpush1.msra.mxu0 0.0
    %1225 = vmatprep.subr.mxu0 0.0
    %1226 = vmatpush1.msra.mxu0 0.0
    %1227 = vmatprep.subr.mxu0 0.0
    %1228 = vmatpush1.msra.mxu0 0.0
    %1229 = vmatprep.subr.mxu0 0.0
    %1230 = vmatpush1.msra.mxu0 0.0
    %1231 = vmatprep.subr.mxu0 0.0
    %1232 = vmatpush1.msra.mxu0 0.0
    %1233 = vmatprep.subr.mxu0 0.0
    %1234 = vmatpush1.msra.mxu0 0.0
    %1235 = vmatprep.subr.mxu0 0.0
    %1236 = vmatpush1.msra.mxu0 0.0
    %1237 = vmatprep.subr.mxu0 0.0
    %1238 = vmatpush1.msra.mxu0 0.0
    %1239 = vmatprep.subr.mxu0 0.0
    %1240 = vmatpush1.msra.mxu0 0.0
    %1241 = vmatprep.subr.mxu0 0.0
    %1242 = vmatpush1.msra.mxu0 0.0
    %1243 = vmatprep.subr.mxu0 0.0
    %1244 = vmatpush1.msra.mxu0 0.0
    %1245 = vmatprep.subr.mxu0 0.0
    %1246 = vmatpush1.msra.mxu0 0.0
    %1247 = vmatprep.subr.mxu0 0.0
    %1248 = vmatpush1.msra.mxu0 0.0
    %1249 = vmatprep.subr.mxu0 0.0
    %1250 = vmatpush1.msra.mxu0 0.0
    %1251 = vmatprep.subr.mxu0 0.0
    %1252 = vmatpush1.msra.mxu0 0.0
    %1253 = vmatprep.subr.mxu0 0.0
    %1254 = vmatpush1.msra.mxu0 0.0
    %1255 = vmatprep.subr.mxu0 0.0
    %1256 = vmatpush1.msra.mxu0 0.0
    %1257 = vmatprep.subr.mxu0 0.0
    %1258 = vmatpush1.msra.mxu0 0.0
    %1259 = vmatprep.subr.mxu0 0.0
    %1260 = vmatpush1.msra.mxu0 0.0
    %1261 = vmatprep.subr.mxu0 0.0
    %1262 = vmatpush1.msra.mxu0 0.0
    %1263 = vmatprep.subr.mxu0 0.0
    %1264 = vmatpush1.msra.mxu0 0.0
    %1265 = vmatprep.subr.mxu0 0.0
    %1266 = vmatpush1.msra.mxu0 0.0
    %1267 = vmatprep.subr.mxu0 0.0
    %1268 = vmatpush1.msra.mxu0 0.0
    %1269 = vmatprep.subr.mxu0 0.0
    %1270 = vmatpush1.msra.mxu0 0.0
    %1271 = vmatprep.subr.mxu0 0.0
    %1272 = vmatpush1.msra.mxu0 0.0
    %1273 = vmatprep.subr.mxu0 0.0
    %1274 = vmatpush1.msra.mxu0 0.0
    %1275 = vmatprep.mubr.f32.mxu0 0.0
    %1276 = vmatmul.mubr.f32.gmra.mrb[0].mxu0 %v1209
    %v1277 = vpop.f32.mrb[0].mxu0
    %v1278 = vadd.f32 0.0, %v1277
    %v1279 = vpop.f32.mrb[0].mxu0
    %1280 = vdwg.mxu0
    %v1281 = vadd.f32 %v320, %v1278
    %v1282 = vxor.u32 %v1281, 2147483648
    %v1283 = vmul.f32 %v1282, 1.442695
    %v1284 = vpow.pop %v1283
    %v1285 = vadd.f32 %v1284, 1.0
    %v1286 = vrcp.pop %v1285
    %v1287 = vmul.f32 1.0, %v1286
    %v1288 = vtanh.pop %v1281
    %v1289 = vmul.f32 %v1287, %v1187
    %1291 = vrot.lane.b32.xlu0 %v1288, 96
    %v1292 = vpop.permute.xlu0 %1291
    %v1294 = vmul.f32 %v1287, %v1292
    %1296 = vrot.lane.b32.xlu0 %v1294, 16
    %v1297 = vpop.permute.xlu0 %1296
    %v1299 = vadd.f32 %v1289, %v1297
    %v1300 = vtanh.pop %v1299
    %1302 = vrot.lane.b32.xlu0 %v1300, 32
    %v1303 = vpop.permute.xlu0 %1302
    %v1305 = vmul.f32 %v1287, %v1303
    %v1308 = vunpack.c.l.s4 1983009808
    %v1309 = vunpack.c.0.s8 %v1308
    %v1310 = vlaneseq
    %v1311 = vshrl.u32 %v1310, 7
    %v1312 = vsub.s32 %v1309, %v1311
    %v1313 = vrot.slane %v1305, %v1312
    %1314 = vrot.lane.b32.xlu0 %v1313, 80
    %v1315 = vpop.permute.xlu0 %1314
    %1317 = vst.msk [vmem:[#allocation3 + $0x2] sm:$0x3] %vm431, %v1315
    %v1318 = vld [vmem:[#allocation3] sm:$0xf]
    %v1319 = vld [vmem:[%s7] sm:$0xff]
    %v1320 = vld [vmem:[%s7 + $0x8] sm:$0xff]
    %v1321 = vld [vmem:[%s7 + $0x10] sm:$0xff]
    %v1322 = vld [vmem:[%s7 + $0x18] sm:$0xff]
    %v1323 = vld [vmem:[%s7 + $0x20] sm:$0xff]
    %v1324 = vld [vmem:[%s7 + $0x28] sm:$0xff]
    %v1325 = vld [vmem:[%s7 + $0x30] sm:$0xff]
    %v1326 = vld [vmem:[%s7 + $0x38] sm:$0xff]
    %v1327 = vld [vmem:[%s7 + $0x40] sm:$0xff]
    %v1328 = vld [vmem:[%s7 + $0x48] sm:$0xff]
    %v1329 = vld [vmem:[%s7 + $0x50] sm:$0xff]
    %v1330 = vld [vmem:[%s7 + $0x58] sm:$0xff]
    %v1331 = vld [vmem:[%s7 + $0x60] sm:$0xff]
    %v1332 = vld [vmem:[%s7 + $0x68] sm:$0xff]
    %v1333 = vld [vmem:[%s7 + $0x70] sm:$0xff]
    %v1334 = vld [vmem:[%s7 + $0x78] sm:$0xff]
    %v1335 = vld [vmem:[%s7 + $0x80] sm:$0xff]
    %v1336 = vld [vmem:[%s7 + $0x88] sm:$0xff]
    %v1337 = vld [vmem:[%s8] sm:$0x1]
    %v1339 = vlaneseq
    %v1340 = vshrl.u32 %v1339, 7
    %v1341 = vsub.s32 0, %v1340
    %v1342 = vrot.slane %v1337, %v1341
    %v1346 = vunpack.c.l.s4 1983009808
    %v1347 = vunpack.c.0.s8 %v1346
    %v1348 = vlaneseq
    %v1349 = vshrl.u32 %v1348, 7
    %v1350 = vsub.s32 %v1347, %v1349
    %v1351 = vrot.slane %v1318, %v1350
    %v1352 = vcombine.high %v1351, %v1351
    %v1354 = vsel %vm321, %v1352, 0
    %1356 = vmatprep.subr.mxu0 0.0
    %1357 = vmatpush1.msra.mxu0 %v1319
    %1358 = vmatprep.subr.mxu0 0.0
    %1359 = vmatpush1.msra.mxu0 %v1320
    %1360 = vmatprep.subr.mxu0 0.0
    %1361 = vmatpush1.msra.mxu0 %v1321
    %1362 = vmatprep.subr.mxu0 0.0
    %1363 = vmatpush1.msra.mxu0 %v1322
    %1364 = vmatprep.subr.mxu0 0.0
    %1365 = vmatpush1.msra.mxu0 %v1323
    %1366 = vmatprep.subr.mxu0 0.0
    %1367 = vmatpush1.msra.mxu0 %v1324
    %1368 = vmatprep.subr.mxu0 0.0
    %1369 = vmatpush1.msra.mxu0 %v1325
    %1370 = vmatprep.subr.mxu0 0.0
    %1371 = vmatpush1.msra.mxu0 %v1326
    %1372 = vmatprep.subr.mxu0 0.0
    %1373 = vmatpush1.msra.mxu0 %v1327
    %1374 = vmatprep.subr.mxu0 0.0
    %1375 = vmatpush1.msra.mxu0 %v1328
    %1376 = vmatprep.subr.mxu0 0.0
    %1377 = vmatpush1.msra.mxu0 %v1329
    %1378 = vmatprep.subr.mxu0 0.0
    %1379 = vmatpush1.msra.mxu0 %v1330
    %1380 = vmatprep.subr.mxu0 0.0
    %1381 = vmatpush1.msra.mxu0 %v1331
    %1382 = vmatprep.subr.mxu0 0.0
    %1383 = vmatpush1.msra.mxu0 %v1332
    %1384 = vmatprep.subr.mxu0 0.0
    %1385 = vmatpush1.msra.mxu0 %v1333
    %1386 = vmatprep.subr.mxu0 0.0
    %1387 = vmatpush1.msra.mxu0 %v1334
    %1388 = vmatprep.subr.mxu0 0.0
    %1389 = vmatpush1.msra.mxu0 %v1335
    %1390 = vmatprep.subr.mxu0 0.0
    %1391 = vmatpush1.msra.mxu0 %v1336
    %1392 = vmatprep.subr.mxu0 0.0
    %1393 = vmatpush1.msra.mxu0 0.0
    %1394 = vmatprep.subr.mxu0 0.0
    %1395 = vmatpush1.msra.mxu0 0.0
    %1396 = vmatprep.subr.mxu0 0.0
    %1397 = vmatpush1.msra.mxu0 0.0
    %1398 = vmatprep.subr.mxu0 0.0
    %1399 = vmatpush1.msra.mxu0 0.0
    %1400 = vmatprep.subr.mxu0 0.0
    %1401 = vmatpush1.msra.mxu0 0.0
    %1402 = vmatprep.subr.mxu0 0.0
    %1403 = vmatpush1.msra.mxu0 0.0
    %1404 = vmatprep.subr.mxu0 0.0
    %1405 = vmatpush1.msra.mxu0 0.0
    %1406 = vmatprep.subr.mxu0 0.0
    %1407 = vmatpush1.msra.mxu0 0.0
    %1408 = vmatprep.subr.mxu0 0.0
    %1409 = vmatpush1.msra.mxu0 0.0
    %1410 = vmatprep.subr.mxu0 0.0
    %1411 = vmatpush1.msra.mxu0 0.0
    %1412 = vmatprep.subr.mxu0 0.0
    %1413 = vmatpush1.msra.mxu0 0.0
    %1414 = vmatprep.subr.mxu0 0.0
    %1415 = vmatpush1.msra.mxu0 0.0
    %1416 = vmatprep.subr.mxu0 0.0
    %1417 = vmatpush1.msra.mxu0 0.0
    %1418 = vmatprep.subr.mxu0 0.0
    %1419 = vmatpush1.msra.mxu0 0.0
    %1420 = vmatprep.mubr.f32.mxu0 %v1354
    %1421 = vmatmul.mubr.f32.gmra.mrb[0].mxu0 %v1351
    %v1422 = vpop.f32.mrb[0].mxu0
    %v1423 = vadd.f32 %v1342, %v1422
    %v1424 = vpop.f32.mrb[0].mxu0
    %1425 = vdwg.mxu0
    %vm1426 = vcmask 9216
    %1427 = vst.msk [vmem:[#allocation5] sm:$0x3] %vm1426, %v1423
    // Predicated region
    $region38: #{simp_att_input_forward.1} parent=1 // pred_check
      _
    $region39: #{simp_att_input_forward.1} parent=1 // pred_check_branch
      %1429 = sbr.rel (0) target = $region41
    $region40: #{simp_att_input_forward.1} parent=1 // pred_region
      %s1431 = ssub.s32 32, 32
      %1432 = vsyncadd [#allocation6], %s1431
      %s1434 = sshll.u32 [#allocation5], 4
      %s1435 = int_to_ptr.vmem [resolvable:$true] %s1434
      %1437 = dma.vmem_to_hbm [thread:$0]  %s1435, 32, %s9, [#allocation6]
    $region41: #{simp_att_input_forward.1} parent=1 // pred_fallthru
      _
    // Predicated region
    $region42: #{simp_att_input_forward.1} parent=1 // pred_check
      _
    $region43: #{simp_att_input_forward.1} parent=1 // pred_check_branch
      %1439 = sbr.rel (0) target = $region45
    $region44: #{simp_att_input_forward.1} parent=1 // pred_region
      %s1441 = ssub.s32 32, 32
      %1442 = vsyncadd [#allocation8], %s1441
      %s1444 = sshll.u32 [#allocation7], 4
      %s1445 = int_to_ptr.vmem [resolvable:$true] %s1444
      %1447 = dma.vmem_to_hbm [thread:$0]  %s1445, 32, %s10, [#allocation8]
    $region45: #{simp_att_input_forward.1} parent=1 // pred_fallthru
      _
    // Predicated region
    $region46: #{simp_att_input_forward.1} parent=1 // pred_check
      _
    $region47: #{simp_att_input_forward.1} parent=1 // pred_check_branch
      %1449 = sbr.rel (0) target = $region49
    $region48: #{simp_att_input_forward.1} parent=1 // pred_region
      %1450 = dma.done [#allocation6], 32
    $region49: #{simp_att_input_forward.1} parent=1 // pred_fallthru
      _
    // Predicated region
    $region50: #{simp_att_input_forward.1} parent=1 // pred_check
      _
    $region51: #{simp_att_input_forward.1} parent=1 // pred_check_branch
      %1452 = sbr.rel (0) target = $region53
    $region52: #{simp_att_input_forward.1} parent=1 // pred_region
      %1453 = dma.done [#allocation8], 32
    $region53: #{simp_att_input_forward.1} parent=1 // pred_fallthru
      _
    %1454 = vsyncpa [#allocation6], 1
    %1455 = vsyncpa [#allocation8], 1

</llo_original>
